<compile_context>
chip_gen: v6e
topology: v6e:2x2x1
jax: 0.10.0
libtpu: 0.0.40
codegen_flags: <defaults>
</compile_context>

<pallas_src>
import functools

import numpy as np
import jax
import jax.numpy as jnp
from jax.experimental import pallas as pl
from jax.experimental.pallas import tpu as pltpu


# ----------------------------------------------------------------------------
# Kernel for the len(LUT.shape) > 3 branch (real 3D LUTs)
# ----------------------------------------------------------------------------
def _tvmn3d_kernel(lut_ref, wb_ref, wg_ref, out_ref, acc_ref, *, D, inv_count):
    g = pl.program_id(0)

    @pl.when(g == 0)
    def _init():
        acc_ref[0] = 0.0
        acc_ref[1] = 0.0

    DD = D * D
    x = lut_ref[...]                             # (B, D, D*D) float32

    # ---- blue / fastest axis: lane-neighbor (+1) diffs ----------------------
    # wb: 0 at wrap positions (lane % D == D-1), 2 at boundary diffs, 1 interior.
    # sum(d^2*w) == sum((d*w)*d) ; sum(relu(d*w_orig)^2) == sum(relu(d*w)^2)
    d = x[:, :, :DD - 1] - x[:, :, 1:]           # (B, D, DD-1)
    dw = d * wb_ref[...]
    s0 = jnp.sum(dw * d)
    rw = jnp.maximum(dw, 0.0)
    s1 = jnp.sum(rw * rw)

    # ---- green / middle axis: lane-neighbor (+D) diffs ----------------------
    # wg: 2 where lane // D in {0, D-2}, else 1 (all positions valid).
    d = x[:, :, :DD - D] - x[:, :, D:]           # (B, D, D*(D-1))
    dw = d * wg_ref[...]
    s0 = s0 + jnp.sum(dw * d)
    rw = jnp.maximum(dw, 0.0)
    s1 = s1 + jnp.sum(rw * rw)

    # ---- red / leading cube axis: sublane-neighbor diffs --------------------
    # boundary (diff index 0 and D-2) gets weight 2 -> add those rows once more
    # for the TV term and 3x more for the monotonicity term (4 = 1 + 3).
    d = x[:, :D - 1, :] - x[:, 1:, :]            # (B, D-1, DD)
    r = jnp.maximum(d, 0.0)
    s0 = s0 + jnp.sum(d * d)
    s1 = s1 + jnp.sum(r * r)
    da = d[:, 0:1, :]
    db = d[:, D - 2:D - 1, :]
    ra = r[:, 0:1, :]
    rb = r[:, D - 2:D - 1, :]
    s0 = s0 + jnp.sum(da * da) + jnp.sum(db * db)
    s1 = s1 + 3.0 * (jnp.sum(ra * ra) + jnp.sum(rb * rb))

    acc_ref[0] = acc_ref[0] + s0
    acc_ref[1] = acc_ref[1] + s1

    @pl.when(g == pl.num_programs(0) - 1)
    def _finalize():
        out_ref[0] = acc_ref[0] * inv_count
        out_ref[1] = acc_ref[1] * inv_count
        out_ref[2] = 0.0


def tvmn_3d(lut, dim, *, max_block_bytes=1 << 20):
    D = int(dim)
    DD = D * D
    lead = int(np.prod(lut.shape[:-3]))                # N * C
    x = jnp.asarray(lut, jnp.float32).reshape(lead, D, DD)

    # Batch as many cubes per grid step as fit the block budget.
    cube_bytes = D * DD * 4
    B = max(1, min(lead, max_block_bytes // cube_bytes))
    G = -(-lead // B)                                  # ceil div
    lead_p = G * B
    if lead_p != lead:                                 # zero cubes contribute 0
        x = jnp.concatenate(
            [x, jnp.zeros((lead_p - lead, D, DD), jnp.float32)], axis=0)

    # Mean denominator is identical for all three directions.
    inv_count = 1.0 / float(lead * D * D * (D - 1))

    # Tiny per-lane weight rows (a few KB total).
    lb = np.arange(DD - 1, dtype=np.int64) % D
    wb = np.where(lb == D - 1, 0.0,
                  np.where((lb == 0) | (lb == D - 2), 2.0, 1.0)).astype(np.float32)
    wb = wb.reshape(1, 1, DD - 1)

    lg = np.arange(DD - D, dtype=np.int64) // D
    wg = np.where((lg == 0) | (lg == D - 2), 2.0, 1.0).astype(np.float32)
    wg = wg.reshape(1, 1, DD - D)

    kernel = functools.partial(_tvmn3d_kernel, D=D, inv_count=inv_count)
    return pl.pallas_call(
        kernel,
        out_shape=jax.ShapeDtypeStruct((3,), jnp.float32),
        grid_spec=pltpu.PrefetchScalarGridSpec(
            num_scalar_prefetch=0,
            grid=(G,),
            in_specs=[
                pl.BlockSpec((B, D, DD), lambda g: (g, 0, 0)),
                pl.BlockSpec((1, 1, DD - 1), lambda g: (0, 0, 0)),
                pl.BlockSpec((1, 1, DD - D), lambda g: (0, 0, 0)),
            ],
            out_specs=pl.BlockSpec(memory_space=pltpu.MemorySpace.SMEM),
            scratch_shapes=[pltpu.SMEM((2,), jnp.float32)],
        ),
        compiler_params=pltpu.CompilerParams(
            dimension_semantics=("arbitrary",)),
    )(x, jnp.asarray(wb), jnp.asarray(wg))


# ----------------------------------------------------------------------------
# Kernel for the len(LUT.shape) <= 3 branch (1D LUTs)
# ----------------------------------------------------------------------------
def _tvmn1d_kernel(lut_ref, out_ref, *, D, inv_count):
    lut = lut_ref[...]                        # (R, D)
    dif = lut[:, :D - 1] - lut[:, 1:]
    s1 = jnp.sum(jnp.maximum(dif, 0.0))       # mean(relu(dif)) numerator
    d2 = dif * dif
    # boundary columns (0 and D-2) get weight 2 -> add them once more
    s0 = jnp.sum(d2) + jnp.sum(d2[:, 0:1]) + jnp.sum(d2[:, D - 2:D - 1])
    out_ref[0] = s0 * inv_count
    out_ref[1] = s1 * inv_count
    out_ref[2] = 0.0


def tvmn_1d(lut, dim):
    D = int(dim)
    lut2 = jnp.asarray(lut, jnp.float32).reshape(-1, D)
    R = lut2.shape[0]
    inv_count = 1.0 / float(R * (D - 1))

    kernel = functools.partial(_tvmn1d_kernel, D=D, inv_count=inv_count)
    return pl.pallas_call(
        kernel,
        out_shape=jax.ShapeDtypeStruct((3,), jnp.float32),
        grid=(1,),
        in_specs=[pl.BlockSpec((R, D), lambda i: (0, 0))],
        out_specs=pl.BlockSpec(memory_space=pltpu.MemorySpace.SMEM),
    )(lut2)


def tvmn_forward(LUT, dim):
    """Mirrors TVMN.forward: branch on LUT rank, return (3,) float32."""
    if LUT.ndim > 3:
        return tvmn_3d(LUT, dim)
    return tvmn_1d(LUT, dim)


# ----------------------------------------------------------------------------
# Plain numpy references (direct transcription of the PyTorch code)
# ----------------------------------------------------------------------------
def _ref_3d(lut, dim):
    wr = np.ones((dim, dim, dim - 1), np.float32); wr[..., [0, dim - 2]] *= 2.0
    wg = np.ones((dim, dim - 1, dim), np.float32); wg[:, [0, dim - 2], :] *= 2.0
    wb = np.ones((dim - 1, dim, dim), np.float32); wb[[0, dim - 2], :, :] *= 2.0
    relu = lambda x: np.maximum(x, 0.0)
    dif_r = lut[..., :-1] - lut[..., 1:]
    dif_g = lut[..., :-1, :] - lut[..., 1:, :]
    dif_b = lut[..., :-1, :, :] - lut[..., 1:, :, :]
    t0 = (dif_r ** 2 * wr).mean() + (dif_g ** 2 * wg).mean() + (dif_b ** 2 * wb).mean()
    t1 = (relu(dif_r * wr) ** 2).mean() + (relu(dif_g * wg) ** 2).mean() \
        + (relu(dif_b * wb) ** 2).mean()
    return np.array([t0, t1, 0.0], np.float32)


def _ref_1d(lut, dim):
    dif = lut[..., :-1] - lut[..., 1:]
    t1 = np.maximum(dif, 0.0).mean()
    dif2 = dif ** 2
    dif2[..., [0, dim - 2]] *= 2.0
    return np.array([dif2.mean(), t1, 0.0], np.float32)


# ----------------------------------------------------------------------------
if __name__ == "__main__":
    dim = 17                                   # small version of default 33
    key = jax.random.PRNGKey(0)
    k1, k2 = jax.random.split(key)

    # >3-dim branch: (N, C, D, D, D), channels-first like PyTorch
    lut3d = jax.random.normal(k1, (2, 3, dim, dim, dim), dtype=jnp.float32)
    ref3d = _ref_3d(np.asarray(lut3d), dim)

    # single-block path (whole lead axis in one grid step)
    out3d = jax.block_until_ready(tvmn_forward(lut3d, dim))
    np.testing.assert_allclose(np.asarray(out3d), ref3d, rtol=1e-4, atol=1e-5)

    # multi-block path (forces grid > 1, zero-padding and SMEM accumulation)
    out3d_m = jax.block_until_ready(tvmn_3d(lut3d, dim, max_block_bytes=60_000))
    np.testing.assert_allclose(np.asarray(out3d_m), ref3d, rtol=1e-4, atol=1e-5)

    # <=3-dim branch: (C, D) 1D LUTs
    lut1d = jax.random.normal(k2, (3, dim), dtype=jnp.float32)
    out1d = jax.block_until_ready(tvmn_forward(lut1d, dim))
    np.testing.assert_allclose(np.asarray(out1d), _ref_1d(np.asarray(lut1d), dim),
                               rtol=1e-4, atol=1e-5)

    print("KERNEL_OK")
</pallas_src>

<mosaic_0001>
module attributes {stable_mosaic.version = 11 : i64} {
  func.func @_tvmn3d_kernel(%arg0: i32, %arg1: memref<6x17x289xf32, #tpu.memory_space<vmem>>, %arg2: memref<1x1x288xf32, #tpu.memory_space<vmem>>, %arg3: memref<1x1x272xf32, #tpu.memory_space<vmem>>, %arg4: memref<3xf32, #tpu.memory_space<smem>>, %arg5: memref<2xf32, #tpu.memory_space<smem>>) attributes {dimension_semantics = [#tpu.dimension_semantics<arbitrary>], iteration_bounds = array<i64: 1>, scalar_prefetch = 0 : i64, scratch_operands = 1 : i64, tpu.core_type = #tpu.core_type<tc>, window_params = [{transform_indices = @transform_0, window_bounds = array<i64: 6, 17, 289>}, {pipeline_mode = #tpu.pipeline_mode<synchronous>, transform_indices = @transform_1, window_bounds = array<i64: 1, 1, 288>}, {pipeline_mode = #tpu.pipeline_mode<synchronous>, transform_indices = @transform_2, window_bounds = array<i64: 1, 1, 272>}, {transform_indices = @transform_3, window_bounds = array<i64: 3>}]} {
    %c0_i32 = arith.constant 0 : i32
    %0 = arith.cmpi eq, %arg0, %c0_i32 : i32
    %1 = arith.extui %0 : i1 to i32
    %c0_i32_0 = arith.constant 0 : i32
    %2 = arith.cmpi ne, %1, %c0_i32_0 : i32
    scf.if %2 {
      %cst_27 = arith.constant 0.000000e+00 : f32
      %c0_28 = arith.constant 0 : index
      %97 = memref.load %arg5[%c0_28] : memref<2xf32, #tpu.memory_space<smem>>
      memref.store %cst_27, %arg5[%c0_28] : memref<2xf32, #tpu.memory_space<smem>>
      %cst_29 = arith.constant 0.000000e+00 : f32
      %c1_30 = arith.constant 1 : index
      %98 = memref.load %arg5[%c1_30] : memref<2xf32, #tpu.memory_space<smem>>
      memref.store %cst_29, %arg5[%c1_30] : memref<2xf32, #tpu.memory_space<smem>>
    } else {
    }
    %c0 = arith.constant 0 : index
    %c0_1 = arith.constant 0 : index
    %c0_2 = arith.constant 0 : index
    %3 = vector.load %arg1[%c0, %c0_1, %c0_2] : memref<6x17x289xf32, #tpu.memory_space<vmem>>, vector<6x17x289xf32>
    %4 = vector.extract_strided_slice %3 {offsets = [0, 0, 0], sizes = [6, 17, 288], strides = [1, 1, 1]} : vector<6x17x289xf32> to vector<6x17x288xf32>
    %5 = vector.extract_strided_slice %3 {offsets = [0, 0, 1], sizes = [6, 17, 288], strides = [1, 1, 1]} : vector<6x17x289xf32> to vector<6x17x288xf32>
    %6 = arith.subf %4, %5 : vector<6x17x288xf32>
    %c0_3 = arith.constant 0 : index
    %c0_4 = arith.constant 0 : index
    %c0_5 = arith.constant 0 : index
    %7 = vector.load %arg2[%c0_3, %c0_4, %c0_5] : memref<1x1x288xf32, #tpu.memory_space<vmem>>, vector<1x1x288xf32>
    %8 = vector.broadcast %7 : vector<1x1x288xf32> to vector<6x17x288xf32>
    %9 = arith.mulf %6, %8 : vector<6x17x288xf32>
    %10 = arith.mulf %9, %6 : vector<6x17x288xf32>
    %11 = vector.shape_cast %10 : vector<6x17x288xf32> to vector<1x6x17x288xf32>
    %cst = arith.constant dense<0.000000e+00> : vector<1xf32>
    %12 = vector.multi_reduction <add>, %11, %cst [1, 2, 3] : vector<1x6x17x288xf32> to vector<1xf32>
    %13 = vector.shape_cast %12 : vector<1xf32> to vector<1x1x1x1xf32>
    %14 = vector.extract %13[0, 0, 0, 0] : f32 from vector<1x1x1x1xf32>
    %cst_6 = arith.constant 0.000000e+00 : f32
    %15 = vector.broadcast %cst_6 : f32 to vector<6x17x288xf32>
    %16 = arith.maximumf %9, %15 : vector<6x17x288xf32>
    %17 = arith.mulf %16, %16 : vector<6x17x288xf32>
    %18 = vector.shape_cast %17 : vector<6x17x288xf32> to vector<1x6x17x288xf32>
    %cst_7 = arith.constant dense<0.000000e+00> : vector<1xf32>
    %19 = vector.multi_reduction <add>, %18, %cst_7 [1, 2, 3] : vector<1x6x17x288xf32> to vector<1xf32>
    %20 = vector.shape_cast %19 : vector<1xf32> to vector<1x1x1x1xf32>
    %21 = vector.extract %20[0, 0, 0, 0] : f32 from vector<1x1x1x1xf32>
    %22 = vector.extract_strided_slice %3 {offsets = [0, 0, 0], sizes = [6, 17, 272], strides = [1, 1, 1]} : vector<6x17x289xf32> to vector<6x17x272xf32>
    %23 = vector.extract_strided_slice %3 {offsets = [0, 0, 17], sizes = [6, 17, 272], strides = [1, 1, 1]} : vector<6x17x289xf32> to vector<6x17x272xf32>
    %24 = arith.subf %22, %23 : vector<6x17x272xf32>
    %c0_8 = arith.constant 0 : index
    %c0_9 = arith.constant 0 : index
    %c0_10 = arith.constant 0 : index
    %25 = vector.load %arg3[%c0_8, %c0_9, %c0_10] : memref<1x1x272xf32, #tpu.memory_space<vmem>>, vector<1x1x272xf32>
    %26 = vector.broadcast %25 : vector<1x1x272xf32> to vector<6x17x272xf32>
    %27 = arith.mulf %24, %26 : vector<6x17x272xf32>
    %28 = arith.mulf %27, %24 : vector<6x17x272xf32>
    %29 = vector.shape_cast %28 : vector<6x17x272xf32> to vector<1x6x17x272xf32>
    %cst_11 = arith.constant dense<0.000000e+00> : vector<1xf32>
    %30 = vector.multi_reduction <add>, %29, %cst_11 [1, 2, 3] : vector<1x6x17x272xf32> to vector<1xf32>
    %31 = vector.shape_cast %30 : vector<1xf32> to vector<1x1x1x1xf32>
    %32 = vector.extract %31[0, 0, 0, 0] : f32 from vector<1x1x1x1xf32>
    %33 = arith.addf %14, %32 : f32
    %cst_12 = arith.constant 0.000000e+00 : f32
    %34 = vector.broadcast %cst_12 : f32 to vector<6x17x272xf32>
    %35 = arith.maximumf %27, %34 : vector<6x17x272xf32>
    %36 = arith.mulf %35, %35 : vector<6x17x272xf32>
    %37 = vector.shape_cast %36 : vector<6x17x272xf32> to vector<1x6x17x272xf32>
    %cst_13 = arith.constant dense<0.000000e+00> : vector<1xf32>
    %38 = vector.multi_reduction <add>, %37, %cst_13 [1, 2, 3] : vector<1x6x17x272xf32> to vector<1xf32>
    %39 = vector.shape_cast %38 : vector<1xf32> to vector<1x1x1x1xf32>
    %40 = vector.extract %39[0, 0, 0, 0] : f32 from vector<1x1x1x1xf32>
    %41 = arith.addf %21, %40 : f32
    %42 = vector.extract_strided_slice %3 {offsets = [0, 0, 0], sizes = [6, 16, 289], strides = [1, 1, 1]} : vector<6x17x289xf32> to vector<6x16x289xf32>
    %43 = vector.extract_strided_slice %3 {offsets = [0, 1, 0], sizes = [6, 16, 289], strides = [1, 1, 1]} : vector<6x17x289xf32> to vector<6x16x289xf32>
    %44 = arith.subf %42, %43 : vector<6x16x289xf32>
    %cst_14 = arith.constant 0.000000e+00 : f32
    %45 = vector.broadcast %cst_14 : f32 to vector<6x16x289xf32>
    %46 = arith.maximumf %44, %45 : vector<6x16x289xf32>
    %47 = arith.mulf %44, %44 : vector<6x16x289xf32>
    %48 = vector.shape_cast %47 : vector<6x16x289xf32> to vector<1x6x16x289xf32>
    %cst_15 = arith.constant dense<0.000000e+00> : vector<1xf32>
    %49 = vector.multi_reduction <add>, %48, %cst_15 [1, 2, 3] : vector<1x6x16x289xf32> to vector<1xf32>
    %50 = vector.shape_cast %49 : vector<1xf32> to vector<1x1x1x1xf32>
    %51 = vector.extract %50[0, 0, 0, 0] : f32 from vector<1x1x1x1xf32>
    %52 = arith.addf %33, %51 : f32
    %53 = arith.mulf %46, %46 : vector<6x16x289xf32>
    %54 = vector.shape_cast %53 : vector<6x16x289xf32> to vector<1x6x16x289xf32>
    %cst_16 = arith.constant dense<0.000000e+00> : vector<1xf32>
    %55 = vector.multi_reduction <add>, %54, %cst_16 [1, 2, 3] : vector<1x6x16x289xf32> to vector<1xf32>
    %56 = vector.shape_cast %55 : vector<1xf32> to vector<1x1x1x1xf32>
    %57 = vector.extract %56[0, 0, 0, 0] : f32 from vector<1x1x1x1xf32>
    %58 = arith.addf %41, %57 : f32
    %59 = vector.extract_strided_slice %44 {offsets = [0, 0, 0], sizes = [6, 1, 289], strides = [1, 1, 1]} : vector<6x16x289xf32> to vector<6x1x289xf32>
    %60 = vector.extract_strided_slice %44 {offsets = [0, 15, 0], sizes = [6, 1, 289], strides = [1, 1, 1]} : vector<6x16x289xf32> to vector<6x1x289xf32>
    %61 = vector.extract_strided_slice %46 {offsets = [0, 0, 0], sizes = [6, 1, 289], strides = [1, 1, 1]} : vector<6x16x289xf32> to vector<6x1x289xf32>
    %62 = vector.extract_strided_slice %46 {offsets = [0, 15, 0], sizes = [6, 1, 289], strides = [1, 1, 1]} : vector<6x16x289xf32> to vector<6x1x289xf32>
    %63 = arith.mulf %59, %59 : vector<6x1x289xf32>
    %64 = vector.shape_cast %63 : vector<6x1x289xf32> to vector<1x6x1x289xf32>
    %cst_17 = arith.constant dense<0.000000e+00> : vector<1xf32>
    %65 = vector.multi_reduction <add>, %64, %cst_17 [1, 2, 3] : vector<1x6x1x289xf32> to vector<1xf32>
    %66 = vector.shape_cast %65 : vector<1xf32> to vector<1x1x1x1xf32>
    %67 = vector.extract %66[0, 0, 0, 0] : f32 from vector<1x1x1x1xf32>
    %68 = arith.addf %52, %67 : f32
    %69 = arith.mulf %60, %60 : vector<6x1x289xf32>
    %70 = vector.shape_cast %69 : vector<6x1x289xf32> to vector<1x6x1x289xf32>
    %cst_18 = arith.constant dense<0.000000e+00> : vector<1xf32>
    %71 = vector.multi_reduction <add>, %70, %cst_18 [1, 2, 3] : vector<1x6x1x289xf32> to vector<1xf32>
    %72 = vector.shape_cast %71 : vector<1xf32> to vector<1x1x1x1xf32>
    %73 = vector.extract %72[0, 0, 0, 0] : f32 from vector<1x1x1x1xf32>
    %74 = arith.addf %68, %73 : f32
    %75 = arith.mulf %61, %61 : vector<6x1x289xf32>
    %76 = vector.shape_cast %75 : vector<6x1x289xf32> to vector<1x6x1x289xf32>
    %cst_19 = arith.constant dense<0.000000e+00> : vector<1xf32>
    %77 = vector.multi_reduction <add>, %76, %cst_19 [1, 2, 3] : vector<1x6x1x289xf32> to vector<1xf32>
    %78 = vector.shape_cast %77 : vector<1xf32> to vector<1x1x1x1xf32>
    %79 = vector.extract %78[0, 0, 0, 0] : f32 from vector<1x1x1x1xf32>
    %80 = arith.mulf %62, %62 : vector<6x1x289xf32>
    %81 = vector.shape_cast %80 : vector<6x1x289xf32> to vector<1x6x1x289xf32>
    %cst_20 = arith.constant dense<0.000000e+00> : vector<1xf32>
    %82 = vector.multi_reduction <add>, %81, %cst_20 [1, 2, 3] : vector<1x6x1x289xf32> to vector<1xf32>
    %83 = vector.shape_cast %82 : vector<1xf32> to vector<1x1x1x1xf32>
    %84 = vector.extract %83[0, 0, 0, 0] : f32 from vector<1x1x1x1xf32>
    %85 = arith.addf %79, %84 : f32
    %cst_21 = arith.constant 3.000000e+00 : f32
    %86 = arith.mulf %cst_21, %85 : f32
    %87 = arith.addf %58, %86 : f32
    %c0_22 = arith.constant 0 : index
    %88 = memref.load %arg5[%c0_22] : memref<2xf32, #tpu.memory_space<smem>>
    %89 = arith.addf %88, %74 : f32
    %c0_23 = arith.constant 0 : index
    %90 = memref.load %arg5[%c0_23] : memref<2xf32, #tpu.memory_space<smem>>
    memref.store %89, %arg5[%c0_23] : memref<2xf32, #tpu.memory_space<smem>>
    %c1 = arith.constant 1 : index
    %91 = memref.load %arg5[%c1] : memref<2xf32, #tpu.memory_space<smem>>
    %92 = arith.addf %91, %87 : f32
    %c1_24 = arith.constant 1 : index
    %93 = memref.load %arg5[%c1_24] : memref<2xf32, #tpu.memory_space<smem>>
    memref.store %92, %arg5[%c1_24] : memref<2xf32, #tpu.memory_space<smem>>
    %c0_i32_25 = arith.constant 0 : i32
    %94 = arith.cmpi eq, %arg0, %c0_i32_25 : i32
    %95 = arith.extui %94 : i1 to i32
    %c0_i32_26 = arith.constant 0 : i32
    %96 = arith.cmpi ne, %95, %c0_i32_26 : i32
    scf.if %96 {
      %c0_27 = arith.constant 0 : index
      %97 = memref.load %arg5[%c0_27] : memref<2xf32, #tpu.memory_space<smem>>
      %cst_28 = arith.constant 3.6043828E-5 : f32
      %98 = arith.mulf %97, %cst_28 : f32
      %c0_29 = arith.constant 0 : index
      %99 = memref.load %arg4[%c0_29] : memref<3xf32, #tpu.memory_space<smem>>
      memref.store %98, %arg4[%c0_29] : memref<3xf32, #tpu.memory_space<smem>>
      %c1_30 = arith.constant 1 : index
      %100 = memref.load %arg5[%c1_30] : memref<2xf32, #tpu.memory_space<smem>>
      %cst_31 = arith.constant 3.6043828E-5 : f32
      %101 = arith.mulf %100, %cst_31 : f32
      %c1_32 = arith.constant 1 : index
      %102 = memref.load %arg4[%c1_32] : memref<3xf32, #tpu.memory_space<smem>>
      memref.store %101, %arg4[%c1_32] : memref<3xf32, #tpu.memory_space<smem>>
      %cst_33 = arith.constant 0.000000e+00 : f32
      %c2 = arith.constant 2 : index
      %103 = memref.load %arg4[%c2] : memref<3xf32, #tpu.memory_space<smem>>
      memref.store %cst_33, %arg4[%c2] : memref<3xf32, #tpu.memory_space<smem>>
    } else {
    }
    return
  }
  func.func @transform_0(%arg0: i32) -> (i32, i32, i32) {
    %c0_i32 = arith.constant 0 : i32
    %c0_i32_0 = arith.constant 0 : i32
    %c0_i32_1 = arith.constant 0 : i32
    return %arg0, %c0_i32, %c0_i32_0 : i32, i32, i32
  }
  func.func @transform_1(%arg0: i32) -> (i32, i32, i32) {
    %c0_i32 = arith.constant 0 : i32
    %c0_i32_0 = arith.constant 0 : i32
    %c0_i32_1 = arith.constant 0 : i32
    %c0_i32_2 = arith.constant 0 : i32
    return %c0_i32, %c0_i32_0, %c0_i32_1 : i32, i32, i32
  }
  func.func @transform_2(%arg0: i32) -> (i32, i32, i32) {
    %c0_i32 = arith.constant 0 : i32
    %c0_i32_0 = arith.constant 0 : i32
    %c0_i32_1 = arith.constant 0 : i32
    %c0_i32_2 = arith.constant 0 : i32
    return %c0_i32, %c0_i32_0, %c0_i32_1 : i32, i32, i32
  }
  func.func @transform_3(%arg0: i32) -> i32 {
    %c0_i32 = arith.constant 0 : i32
    %c0_i32_0 = arith.constant 0 : i32
    return %c0_i32 : i32
  }
}

</mosaic_0001>

<llo_original>
// kernel: tpu_custom_call.1
$region0: #{tpu_custom_call.1}
  #allocation0 [shape = 'u32[]', space=smem, size = 0x4, offset = 0x4, fixed_abs, tag = 'smem constant byte address 0x4 - core index']
  #allocation1 [shape = 'u32[144,128]{1,0:T(1,128)}', space=vmem, size = 0x12000, scoped, tag = 'internal scratch']
  #allocation2 [shape = 'f32[2]{0:T(128)}', space=smem, size = 0x200, scoped, tag = 'scratch operand']
  %s0 = inlined_call_operand.vmem [shape: f32[6,17,289], index: 0, kind: input, shape index: {}]
  %s1 = inlined_call_operand.vmem [shape: f32[1,1,288], index: 1, kind: input, shape index: {}]
  %s2 = inlined_call_operand.vmem [shape: f32[1,1,272], index: 2, kind: input, shape index: {}]
  %s3 = inlined_call_operand.hbm [shape: f32[3], index: 3, kind: output, shape index: {}]
  %s4 = sld [smem:[#allocation0]]
  $region30: #{tpu_custom_call.1} parent=0
    _
  %s6 = ssub.s32 1, %s4
  %s7 = scalar_select 0, %s6, %s4
  $region1: #{tpu_custom_call.1} parent=0
    #allocation3 [shape = 'u8[512]{0}', space=smem, size = 0x200, scoped, tag = 'output window, operand 0, single buffered']
    #allocation4 [shape = 's32[1]{0}', space=sflag, size = 0x4, scoped, tag = 'scoped memory for tpu_custom_call.1']
    %8 = vsyncpa [#allocation4], 0
    // Predicated region
    $region2: #{tpu_custom_call.1} parent=1 // pred_check
      _
    $region3: #{tpu_custom_call.1} parent=1 // pred_check_branch
      %10 = sbr.rel (0) target = $region5
    $region4: #{tpu_custom_call.1} parent=1 // pred_region
      _
    $region5: #{tpu_custom_call.1} parent=1 // pred_fallthru
      _
    // Predicated region
    $region6: #{tpu_custom_call.1} parent=1 // pred_check
      _
    $region7: #{tpu_custom_call.1} parent=1 // pred_check_branch
      %12 = sbr.rel (0) target = $region9
    $region8: #{tpu_custom_call.1} parent=1 // pred_region
      _
    $region9: #{tpu_custom_call.1} parent=1 // pred_fallthru
      _
    // Predicated region
    $region10: #{tpu_custom_call.1} parent=1 // pred_check
      _
    $region11: #{tpu_custom_call.1} parent=1 // pred_check_branch
      %14 = sbr.rel (0) target = $region13
    $region12: #{tpu_custom_call.1} parent=1 // pred_region
      _
    $region13: #{tpu_custom_call.1} parent=1 // pred_fallthru
      _
    %p15 = scmp.eq.s32.totalorder 0, 0
    // Predicated region
    $region14: #{tpu_custom_call.1} parent=1 // pred_check
      %p16 = pneg %p15
    $region15: #{tpu_custom_call.1} parent=1 // pred_check_branch
      %18 = sbr.rel (%p16) target = $region17
    $region16: #{tpu_custom_call.1} parent=1 // pred_region
      %s19 = scalar_lea.smem [#allocation2], 0
      %20 = sst [smem:[%s19]] 0.0
      %s21 = scalar_lea.smem [#allocation2], 1
      %22 = sst [smem:[%s21]] 0.0
    $region17: #{tpu_custom_call.1} parent=1 // pred_fallthru
      _
    %v23 = vld [vmem:[%s0] sm:$0xff]
    %v24 = vld [vmem:[%s0 + $0x8] sm:$0xff]
    %v25 = vld [vmem:[%s0 + $0x10] sm:$0xff]
    %v26 = vld [vmem:[%s0 + $0x18] sm:$0xff]
    %v27 = vld [vmem:[%s0 + $0x20] sm:$0xff]
    %v28 = vld [vmem:[%s0 + $0x28] sm:$0xff]
    %v29 = vld [vmem:[%s0 + $0x30] sm:$0x1]
    %v30 = vld [vmem:[%s0 + $0x38] sm:$0x1]
    %v31 = vld [vmem:[%s0 + $0x40] sm:$0x1]
    %v32 = vld [vmem:[%s0 + $0x48] sm:$0xff]
    %v33 = vld [vmem:[%s0 + $0x50] sm:$0xff]
    %v34 = vld [vmem:[%s0 + $0x58] sm:$0xff]
    %v35 = vld [vmem:[%s0 + $0x60] sm:$0xff]
    %v36 = vld [vmem:[%s0 + $0x68] sm:$0xff]
    %v37 = vld [vmem:[%s0 + $0x70] sm:$0xff]
    %v38 = vld [vmem:[%s0 + $0x78] sm:$0x1]
    %v39 = vld [vmem:[%s0 + $0x80] sm:$0x1]
    %v40 = vld [vmem:[%s0 + $0x88] sm:$0x1]
    %v41 = vld [vmem:[%s0 + $0x90] sm:$0xff]
    %v42 = vld [vmem:[%s0 + $0x98] sm:$0xff]
    %v43 = vld [vmem:[%s0 + $0xa0] sm:$0xff]
    %v44 = vld [vmem:[%s0 + $0xa8] sm:$0xff]
    %v45 = vld [vmem:[%s0 + $0xb0] sm:$0xff]
    %v46 = vld [vmem:[%s0 + $0xb8] sm:$0xff]
    %v47 = vld [vmem:[%s0 + $0xc0] sm:$0x1]
    %v48 = vld [vmem:[%s0 + $0xc8] sm:$0x1]
    %v49 = vld [vmem:[%s0 + $0xd0] sm:$0x1]
    %v50 = vld [vmem:[%s0 + $0xd8] sm:$0xff]
    %v51 = vld [vmem:[%s0 + $0xe0] sm:$0xff]
    %v52 = vld [vmem:[%s0 + $0xe8] sm:$0xff]
    %v53 = vld [vmem:[%s0 + $0xf0] sm:$0xff]
    %v54 = vld [vmem:[%s0 + $0xf8] sm:$0xff]
    %v55 = vld [vmem:[%s0 + $0x100] sm:$0xff]
    %v56 = vld [vmem:[%s0 + $0x108] sm:$0x1]
    %v57 = vld [vmem:[%s0 + $0x110] sm:$0x1]
    %v58 = vld [vmem:[%s0 + $0x118] sm:$0x1]
    %v59 = vld [vmem:[%s0 + $0x120] sm:$0xff]
    %v60 = vld [vmem:[%s0 + $0x128] sm:$0xff]
    %v61 = vld [vmem:[%s0 + $0x130] sm:$0xff]
    %v62 = vld [vmem:[%s0 + $0x138] sm:$0xff]
    %v63 = vld [vmem:[%s0 + $0x140] sm:$0xff]
    %v64 = vld [vmem:[%s0 + $0x148] sm:$0xff]
    %v65 = vld [vmem:[%s0 + $0x150] sm:$0x1]
    %v66 = vld [vmem:[%s0 + $0x158] sm:$0x1]
    %v67 = vld [vmem:[%s0 + $0x160] sm:$0x1]
    %v68 = vld [vmem:[%s0 + $0x168] sm:$0xff]
    %v69 = vld [vmem:[%s0 + $0x170] sm:$0xff]
    %v70 = vld [vmem:[%s0 + $0x178] sm:$0xff]
    %v71 = vld [vmem:[%s0 + $0x180] sm:$0xff]
    %v72 = vld [vmem:[%s0 + $0x188] sm:$0xff]
    %v73 = vld [vmem:[%s0 + $0x190] sm:$0xff]
    %v74 = vld [vmem:[%s0 + $0x198] sm:$0x1]
    %v75 = vld [vmem:[%s0 + $0x1a0] sm:$0x1]
    %v76 = vld [vmem:[%s0 + $0x1a8] sm:$0x1]
    %131 = vrot.lane.b32.xlu0 %v23, 127
    %v132 = vpop.permute.xlu0 %131
    %133 = vrot.lane.b32.xlu0 %v24, 127
    %v134 = vpop.permute.xlu0 %133
    %135 = vrot.lane.b32.xlu0 %v25, 127
    %v136 = vpop.permute.xlu0 %135
    %137 = vrot.lane.b32.xlu0 %v26, 127
    %v138 = vpop.permute.xlu0 %137
    %139 = vrot.lane.b32.xlu0 %v27, 127
    %v140 = vpop.permute.xlu0 %139
    %141 = vrot.lane.b32.xlu0 %v28, 127
    %v142 = vpop.permute.xlu0 %141
    %143 = vrot.lane.b32.xlu0 %v29, 127
    %v144 = vpop.permute.xlu0 %143
    %145 = vrot.lane.b32.xlu0 %v30, 127
    %v146 = vpop.permute.xlu0 %145
    %147 = vrot.lane.b32.xlu0 %v31, 127
    %v148 = vpop.permute.xlu0 %147
    %149 = vrot.lane.b32.xlu0 %v32, 127
    %v150 = vpop.permute.xlu0 %149
    %151 = vrot.lane.b32.xlu0 %v33, 127
    %v152 = vpop.permute.xlu0 %151
    %153 = vrot.lane.b32.xlu0 %v34, 127
    %v154 = vpop.permute.xlu0 %153
    %155 = vrot.lane.b32.xlu0 %v35, 127
    %v156 = vpop.permute.xlu0 %155
    %157 = vrot.lane.b32.xlu0 %v36, 127
    %v158 = vpop.permute.xlu0 %157
    %159 = vrot.lane.b32.xlu0 %v37, 127
    %v160 = vpop.permute.xlu0 %159
    %161 = vrot.lane.b32.xlu0 %v38, 127
    %v162 = vpop.permute.xlu0 %161
    %163 = vrot.lane.b32.xlu0 %v39, 127
    %v164 = vpop.permute.xlu0 %163
    %165 = vrot.lane.b32.xlu0 %v40, 127
    %v166 = vpop.permute.xlu0 %165
    %167 = vrot.lane.b32.xlu0 %v41, 127
    %v168 = vpop.permute.xlu0 %167
    %169 = vrot.lane.b32.xlu0 %v42, 127
    %v170 = vpop.permute.xlu0 %169
    %171 = vrot.lane.b32.xlu0 %v43, 127
    %v172 = vpop.permute.xlu0 %171
    %173 = vrot.lane.b32.xlu0 %v44, 127
    %v174 = vpop.permute.xlu0 %173
    %175 = vrot.lane.b32.xlu0 %v45, 127
    %v176 = vpop.permute.xlu0 %175
    %177 = vrot.lane.b32.xlu0 %v46, 127
    %v178 = vpop.permute.xlu0 %177
    %179 = vrot.lane.b32.xlu0 %v47, 127
    %v180 = vpop.permute.xlu0 %179
    %181 = vrot.lane.b32.xlu0 %v48, 127
    %v182 = vpop.permute.xlu0 %181
    %183 = vrot.lane.b32.xlu0 %v49, 127
    %v184 = vpop.permute.xlu0 %183
    %185 = vrot.lane.b32.xlu0 %v50, 127
    %v186 = vpop.permute.xlu0 %185
    %187 = vrot.lane.b32.xlu0 %v51, 127
    %v188 = vpop.permute.xlu0 %187
    %189 = vrot.lane.b32.xlu0 %v52, 127
    %v190 = vpop.permute.xlu0 %189
    %191 = vrot.lane.b32.xlu0 %v53, 127
    %v192 = vpop.permute.xlu0 %191
    %193 = vrot.lane.b32.xlu0 %v54, 127
    %v194 = vpop.permute.xlu0 %193
    %195 = vrot.lane.b32.xlu0 %v55, 127
    %v196 = vpop.permute.xlu0 %195
    %197 = vrot.lane.b32.xlu0 %v56, 127
    %v198 = vpop.permute.xlu0 %197
    %199 = vrot.lane.b32.xlu0 %v57, 127
    %v200 = vpop.permute.xlu0 %199
    %201 = vrot.lane.b32.xlu0 %v58, 127
    %v202 = vpop.permute.xlu0 %201
    %203 = vrot.lane.b32.xlu0 %v59, 127
    %v204 = vpop.permute.xlu0 %203
    %205 = vrot.lane.b32.xlu0 %v60, 127
    %v206 = vpop.permute.xlu0 %205
    %207 = vrot.lane.b32.xlu0 %v61, 127
    %v208 = vpop.permute.xlu0 %207
    %209 = vrot.lane.b32.xlu0 %v62, 127
    %v210 = vpop.permute.xlu0 %209
    %211 = vrot.lane.b32.xlu0 %v63, 127
    %v212 = vpop.permute.xlu0 %211
    %213 = vrot.lane.b32.xlu0 %v64, 127
    %v214 = vpop.permute.xlu0 %213
    %215 = vrot.lane.b32.xlu0 %v65, 127
    %v216 = vpop.permute.xlu0 %215
    %217 = vrot.lane.b32.xlu0 %v66, 127
    %v218 = vpop.permute.xlu0 %217
    %219 = vrot.lane.b32.xlu0 %v67, 127
    %v220 = vpop.permute.xlu0 %219
    %221 = vrot.lane.b32.xlu0 %v68, 127
    %v222 = vpop.permute.xlu0 %221
    %223 = vrot.lane.b32.xlu0 %v69, 127
    %v224 = vpop.permute.xlu0 %223
    %225 = vrot.lane.b32.xlu0 %v70, 127
    %v226 = vpop.permute.xlu0 %225
    %227 = vrot.lane.b32.xlu0 %v71, 127
    %v228 = vpop.permute.xlu0 %227
    %229 = vrot.lane.b32.xlu0 %v72, 127
    %v230 = vpop.permute.xlu0 %229
    %231 = vrot.lane.b32.xlu0 %v73, 127
    %v232 = vpop.permute.xlu0 %231
    %233 = vrot.lane.b32.xlu0 %v74, 127
    %v234 = vpop.permute.xlu0 %233
    %235 = vrot.lane.b32.xlu0 %v75, 127
    %v236 = vpop.permute.xlu0 %235
    %237 = vrot.lane.b32.xlu0 %v76, 127
    %v238 = vpop.permute.xlu0 %237
    %vm239 = vcmask 1039360
    %v240 = vsel %vm239, %v132, %v134
    %v241 = vsel %vm239, %v134, %v136
    %v242 = vsel %vm239, %v138, %v140
    %v243 = vsel %vm239, %v140, %v142
    %v244 = vsel %vm239, %v144, %v146
    %v245 = vsel %vm239, %v146, %v148
    %v246 = vsel %vm239, %v150, %v152
    %v247 = vsel %vm239, %v152, %v154
    %v248 = vsel %vm239, %v156, %v158
    %v249 = vsel %vm239, %v158, %v160
    %v250 = vsel %vm239, %v162, %v164
    %v251 = vsel %vm239, %v164, %v166
    %v252 = vsel %vm239, %v168, %v170
    %v253 = vsel %vm239, %v170, %v172
    %v254 = vsel %vm239, %v174, %v176
    %v255 = vsel %vm239, %v176, %v178
    %v256 = vsel %vm239, %v180, %v182
    %v257 = vsel %vm239, %v182, %v184
    %v258 = vsel %vm239, %v186, %v188
    %v259 = vsel %vm239, %v188, %v190
    %v260 = vsel %vm239, %v192, %v194
    %v261 = vsel %vm239, %v194, %v196
    %v262 = vsel %vm239, %v198, %v200
    %v263 = vsel %vm239, %v200, %v202
    %v264 = vsel %vm239, %v204, %v206
    %v265 = vsel %vm239, %v206, %v208
    %v266 = vsel %vm239, %v210, %v212
    %v267 = vsel %vm239, %v212, %v214
    %v268 = vsel %vm239, %v216, %v218
    %v269 = vsel %vm239, %v218, %v220
    %v270 = vsel %vm239, %v222, %v224
    %v271 = vsel %vm239, %v224, %v226
    %v272 = vsel %vm239, %v228, %v230
    %v273 = vsel %vm239, %v230, %v232
    %v274 = vsel %vm239, %v234, %v236
    %v275 = vsel %vm239, %v236, %v238
    %v330 = vsub.f32 %v23, %v240
    %v331 = vsub.f32 %v24, %v241
    %v332 = vsub.f32 %v25, %v136
    %v333 = vsub.f32 %v26, %v242
    %v334 = vsub.f32 %v27, %v243
    %v335 = vsub.f32 %v28, %v142
    %v336 = vsub.f32 %v29, %v244
    %v337 = vsub.f32 %v30, %v245
    %v338 = vsub.f32 %v31, %v148
    %v339 = vsub.f32 %v32, %v246
    %v340 = vsub.f32 %v33, %v247
    %v341 = vsub.f32 %v34, %v154
    %v342 = vsub.f32 %v35, %v248
    %v343 = vsub.f32 %v36, %v249
    %v344 = vsub.f32 %v37, %v160
    %v345 = vsub.f32 %v38, %v250
    %v346 = vsub.f32 %v39, %v251
    %v347 = vsub.f32 %v40, %v166
    %v348 = vsub.f32 %v41, %v252
    %v349 = vsub.f32 %v42, %v253
    %v350 = vsub.f32 %v43, %v172
    %v351 = vsub.f32 %v44, %v254
    %v352 = vsub.f32 %v45, %v255
    %v353 = vsub.f32 %v46, %v178
    %v354 = vsub.f32 %v47, %v256
    %v355 = vsub.f32 %v48, %v257
    %v356 = vsub.f32 %v49, %v184
    %v357 = vsub.f32 %v50, %v258
    %v358 = vsub.f32 %v51, %v259
    %v359 = vsub.f32 %v52, %v190
    %v360 = vsub.f32 %v53, %v260
    %v361 = vsub.f32 %v54, %v261
    %v362 = vsub.f32 %v55, %v196
    %v363 = vsub.f32 %v56, %v262
    %v364 = vsub.f32 %v57, %v263
    %v365 = vsub.f32 %v58, %v202
    %v366 = vsub.f32 %v59, %v264
    %v367 = vsub.f32 %v60, %v265
    %v368 = vsub.f32 %v61, %v208
    %v369 = vsub.f32 %v62, %v266
    %v370 = vsub.f32 %v63, %v267
    %v371 = vsub.f32 %v64, %v214
    %v372 = vsub.f32 %v65, %v268
    %v373 = vsub.f32 %v66, %v269
    %v374 = vsub.f32 %v67, %v220
    %v375 = vsub.f32 %v68, %v270
    %v376 = vsub.f32 %v69, %v271
    %v377 = vsub.f32 %v70, %v226
    %v378 = vsub.f32 %v71, %v272
    %v379 = vsub.f32 %v72, %v273
    %v380 = vsub.f32 %v73, %v232
    %v381 = vsub.f32 %v74, %v274
    %v382 = vsub.f32 %v75, %v275
    %v383 = vsub.f32 %v76, %v238
    %v384 = vld [vmem:[%s1] sm:$0x7]
    %v386 = vlaneseq
    %v387 = vshrl.u32 %v386, 7
    %v388 = vsub.s32 0, %v387
    %v389 = vrot.slane %v384, %v388
    %v390 = vlaneseq
    %v391 = vshrl.u32 %v390, 7
    %v392 = vsub.s32 1, %v391
    %v393 = vrot.slane %v384, %v392
    %v394 = vlaneseq
    %v395 = vshrl.u32 %v394, 7
    %v396 = vsub.s32 2, %v395
    %v397 = vrot.slane %v384, %v396
    %v401 = vmul.f32 %v330, %v389
    %v402 = vmul.f32 %v331, %v393
    %v403 = vmul.f32 %v332, %v397
    %v404 = vmul.f32 %v333, %v389
    %v405 = vmul.f32 %v334, %v393
    %v406 = vmul.f32 %v335, %v397
    %v407 = vmul.f32 %v336, %v389
    %v408 = vmul.f32 %v337, %v393
    %v409 = vmul.f32 %v338, %v397
    %v410 = vmul.f32 %v339, %v389
    %v411 = vmul.f32 %v340, %v393
    %v412 = vmul.f32 %v341, %v397
    %v413 = vmul.f32 %v342, %v389
    %v414 = vmul.f32 %v343, %v393
    %v415 = vmul.f32 %v344, %v397
    %v416 = vmul.f32 %v345, %v389
    %v417 = vmul.f32 %v346, %v393
    %v418 = vmul.f32 %v347, %v397
    %v419 = vmul.f32 %v348, %v389
    %v420 = vmul.f32 %v349, %v393
    %v421 = vmul.f32 %v350, %v397
    %v422 = vmul.f32 %v351, %v389
    %v423 = vmul.f32 %v352, %v393
    %v424 = vmul.f32 %v353, %v397
    %v425 = vmul.f32 %v354, %v389
    %v426 = vmul.f32 %v355, %v393
    %v427 = vmul.f32 %v356, %v397
    %v428 = vmul.f32 %v357, %v389
    %v429 = vmul.f32 %v358, %v393
    %v430 = vmul.f32 %v359, %v397
    %v431 = vmul.f32 %v360, %v389
    %v432 = vmul.f32 %v361, %v393
    %v433 = vmul.f32 %v362, %v397
    %v434 = vmul.f32 %v363, %v389
    %v435 = vmul.f32 %v364, %v393
    %v436 = vmul.f32 %v365, %v397
    %v437 = vmul.f32 %v366, %v389
    %v438 = vmul.f32 %v367, %v393
    %v439 = vmul.f32 %v368, %v397
    %v440 = vmul.f32 %v369, %v389
    %v441 = vmul.f32 %v370, %v393
    %v442 = vmul.f32 %v371, %v397
    %v443 = vmul.f32 %v372, %v389
    %v444 = vmul.f32 %v373, %v393
    %v445 = vmul.f32 %v374, %v397
    %v446 = vmul.f32 %v375, %v389
    %v447 = vmul.f32 %v376, %v393
    %v448 = vmul.f32 %v377, %v397
    %v449 = vmul.f32 %v378, %v389
    %v450 = vmul.f32 %v379, %v393
    %v451 = vmul.f32 %v380, %v397
    %v452 = vmul.f32 %v381, %v389
    %v453 = vmul.f32 %v382, %v393
    %v454 = vmul.f32 %v383, %v397
    %v455 = vmul.f32 %v401, %v330
    %v456 = vmul.f32 %v402, %v331
    %v457 = vmul.f32 %v403, %v332
    %v458 = vmul.f32 %v404, %v333
    %v459 = vmul.f32 %v405, %v334
    %v460 = vmul.f32 %v406, %v335
    %v461 = vmul.f32 %v407, %v336
    %v462 = vmul.f32 %v408, %v337
    %v463 = vmul.f32 %v409, %v338
    %v464 = vmul.f32 %v410, %v339
    %v465 = vmul.f32 %v411, %v340
    %v466 = vmul.f32 %v412, %v341
    %v467 = vmul.f32 %v413, %v342
    %v468 = vmul.f32 %v414, %v343
    %v469 = vmul.f32 %v415, %v344
    %v470 = vmul.f32 %v416, %v345
    %v471 = vmul.f32 %v417, %v346
    %v472 = vmul.f32 %v418, %v347
    %v473 = vmul.f32 %v419, %v348
    %v474 = vmul.f32 %v420, %v349
    %v475 = vmul.f32 %v421, %v350
    %v476 = vmul.f32 %v422, %v351
    %v477 = vmul.f32 %v423, %v352
    %v478 = vmul.f32 %v424, %v353
    %v479 = vmul.f32 %v425, %v354
    %v480 = vmul.f32 %v426, %v355
    %v481 = vmul.f32 %v427, %v356
    %v482 = vmul.f32 %v428, %v357
    %v483 = vmul.f32 %v429, %v358
    %v484 = vmul.f32 %v430, %v359
    %v485 = vmul.f32 %v431, %v360
    %v486 = vmul.f32 %v432, %v361
    %v487 = vmul.f32 %v433, %v362
    %v488 = vmul.f32 %v434, %v363
    %v489 = vmul.f32 %v435, %v364
    %v490 = vmul.f32 %v436, %v365
    %v491 = vmul.f32 %v437, %v366
    %v492 = vmul.f32 %v438, %v367
    %v493 = vmul.f32 %v439, %v368
    %v494 = vmul.f32 %v440, %v369
    %v495 = vmul.f32 %v441, %v370
    %v496 = vmul.f32 %v442, %v371
    %v497 = vmul.f32 %v443, %v372
    %v498 = vmul.f32 %v444, %v373
    %v499 = vmul.f32 %v445, %v374
    %v500 = vmul.f32 %v446, %v375
    %v501 = vmul.f32 %v447, %v376
    %v502 = vmul.f32 %v448, %v377
    %v503 = vmul.f32 %v449, %v378
    %v504 = vmul.f32 %v450, %v379
    %v505 = vmul.f32 %v451, %v380
    %v506 = vmul.f32 %v452, %v381
    %v507 = vmul.f32 %v453, %v382
    %v508 = vmul.f32 %v454, %v383
    %v509 = vadd.f32 %v455, %v456
    %vm510 = vcmask 261120
    %v511 = vsel %vm510, %v457, 0.0
    %v512 = vadd.f32 %v509, %v511
    %v513 = vadd.f32 %v512, %v458
    %v514 = vadd.f32 %v513, %v459
    %v515 = vsel %vm510, %v460, 0.0
    %v516 = vadd.f32 %v514, %v515
    %vm517 = vcmask 1040384
    %v518 = vsel %vm517, %v461, 0.0
    %v519 = vadd.f32 %v516, %v518
    %v520 = vsel %vm517, %v462, 0.0
    %v521 = vadd.f32 %v519, %v520
    %vm522 = vcmask 253952
    %v523 = vsel %vm522, %v463, 0.0
    %v524 = vadd.f32 %v521, %v523
    %v525 = vadd.f32 %v524, %v464
    %v526 = vadd.f32 %v525, %v465
    %v527 = vsel %vm510, %v466, 0.0
    %v528 = vadd.f32 %v526, %v527
    %v529 = vadd.f32 %v528, %v467
    %v530 = vadd.f32 %v529, %v468
    %v531 = vsel %vm510, %v469, 0.0
    %v532 = vadd.f32 %v530, %v531
    %v533 = vsel %vm517, %v470, 0.0
    %v534 = vadd.f32 %v532, %v533
    %v535 = vsel %vm517, %v471, 0.0
    %v536 = vadd.f32 %v534, %v535
    %v537 = vsel %vm522, %v472, 0.0
    %v538 = vadd.f32 %v536, %v537
    %v539 = vadd.f32 %v538, %v473
    %v540 = vadd.f32 %v539, %v474
    %v541 = vsel %vm510, %v475, 0.0
    %v542 = vadd.f32 %v540, %v541
    %v543 = vadd.f32 %v542, %v476
    %v544 = vadd.f32 %v543, %v477
    %v545 = vsel %vm510, %v478, 0.0
    %v546 = vadd.f32 %v544, %v545
    %v547 = vsel %vm517, %v479, 0.0
    %v548 = vadd.f32 %v546, %v547
    %v549 = vsel %vm517, %v480, 0.0
    %v550 = vadd.f32 %v548, %v549
    %v551 = vsel %vm522, %v481, 0.0
    %v552 = vadd.f32 %v550, %v551
    %v553 = vadd.f32 %v552, %v482
    %v554 = vadd.f32 %v553, %v483
    %v555 = vsel %vm510, %v484, 0.0
    %v556 = vadd.f32 %v554, %v555
    %v557 = vadd.f32 %v556, %v485
    %v558 = vadd.f32 %v557, %v486
    %v559 = vsel %vm510, %v487, 0.0
    %v560 = vadd.f32 %v558, %v559
    %v561 = vsel %vm517, %v488, 0.0
    %v562 = vadd.f32 %v560, %v561
    %v563 = vsel %vm517, %v489, 0.0
    %v564 = vadd.f32 %v562, %v563
    %v565 = vsel %vm522, %v490, 0.0
    %v566 = vadd.f32 %v564, %v565
    %v567 = vadd.f32 %v566, %v491
    %v568 = vadd.f32 %v567, %v492
    %v569 = vsel %vm510, %v493, 0.0
    %v570 = vadd.f32 %v568, %v569
    %v571 = vadd.f32 %v570, %v494
    %v572 = vadd.f32 %v571, %v495
    %v573 = vsel %vm510, %v496, 0.0
    %v574 = vadd.f32 %v572, %v573
    %v575 = vsel %vm517, %v497, 0.0
    %v576 = vadd.f32 %v574, %v575
    %v577 = vsel %vm517, %v498, 0.0
    %v578 = vadd.f32 %v576, %v577
    %v579 = vsel %vm522, %v499, 0.0
    %v580 = vadd.f32 %v578, %v579
    %v581 = vadd.f32 %v580, %v500
    %v582 = vadd.f32 %v581, %v501
    %v583 = vsel %vm510, %v502, 0.0
    %v584 = vadd.f32 %v582, %v583
    %v585 = vadd.f32 %v584, %v503
    %v586 = vadd.f32 %v585, %v504
    %v587 = vsel %vm510, %v505, 0.0
    %v588 = vadd.f32 %v586, %v587
    %v589 = vsel %vm517, %v506, 0.0
    %v590 = vadd.f32 %v588, %v589
    %v591 = vsel %vm517, %v507, 0.0
    %v592 = vadd.f32 %v590, %v591
    %v593 = vsel %vm522, %v508, 0.0
    %v594 = vadd.f32 %v592, %v593
    %595 = vadd.xlane.f32.xlu0 %v594
    %v596 = vpop.xlane.xlu0 %595
    %v597 = vrot.slane %v596, 4
    %v598 = vadd.f32 %v596, %v597
    %v599 = vrot.slane %v598, 2
    %v600 = vadd.f32 %v598, %v599
    %v601 = vrot.slane %v600, 1
    %v602 = vadd.f32 %v600, %v601
    %s603 = vtos %v602
    %v604 = vmax.f32 %v401, 0.0
    %v605 = vmax.f32 %v402, 0.0
    %v606 = vmax.f32 %v403, 0.0
    %v607 = vmax.f32 %v404, 0.0
    %v608 = vmax.f32 %v405, 0.0
    %v609 = vmax.f32 %v406, 0.0
    %v610 = vmax.f32 %v407, 0.0
    %v611 = vmax.f32 %v408, 0.0
    %v612 = vmax.f32 %v409, 0.0
    %v613 = vmax.f32 %v410, 0.0
    %v614 = vmax.f32 %v411, 0.0
    %v615 = vmax.f32 %v412, 0.0
    %v616 = vmax.f32 %v413, 0.0
    %v617 = vmax.f32 %v414, 0.0
    %v618 = vmax.f32 %v415, 0.0
    %v619 = vmax.f32 %v416, 0.0
    %v620 = vmax.f32 %v417, 0.0
    %v621 = vmax.f32 %v418, 0.0
    %v622 = vmax.f32 %v419, 0.0
    %v623 = vmax.f32 %v420, 0.0
    %v624 = vmax.f32 %v421, 0.0
    %v625 = vmax.f32 %v422, 0.0
    %v626 = vmax.f32 %v423, 0.0
    %v627 = vmax.f32 %v424, 0.0
    %v628 = vmax.f32 %v425, 0.0
    %v629 = vmax.f32 %v426, 0.0
    %v630 = vmax.f32 %v427, 0.0
    %v631 = vmax.f32 %v428, 0.0
    %v632 = vmax.f32 %v429, 0.0
    %v633 = vmax.f32 %v430, 0.0
    %v634 = vmax.f32 %v431, 0.0
    %v635 = vmax.f32 %v432, 0.0
    %v636 = vmax.f32 %v433, 0.0
    %v637 = vmax.f32 %v434, 0.0
    %v638 = vmax.f32 %v435, 0.0
    %v639 = vmax.f32 %v436, 0.0
    %v640 = vmax.f32 %v437, 0.0
    %v641 = vmax.f32 %v438, 0.0
    %v642 = vmax.f32 %v439, 0.0
    %v643 = vmax.f32 %v440, 0.0
    %v644 = vmax.f32 %v441, 0.0
    %v645 = vmax.f32 %v442, 0.0
    %v646 = vmax.f32 %v443, 0.0
    %v647 = vmax.f32 %v444, 0.0
    %v648 = vmax.f32 %v445, 0.0
    %v649 = vmax.f32 %v446, 0.0
    %v650 = vmax.f32 %v447, 0.0
    %v651 = vmax.f32 %v448, 0.0
    %v652 = vmax.f32 %v449, 0.0
    %v653 = vmax.f32 %v450, 0.0
    %v654 = vmax.f32 %v451, 0.0
    %v655 = vmax.f32 %v452, 0.0
    %v656 = vmax.f32 %v453, 0.0
    %v657 = vmax.f32 %v454, 0.0
    %v658 = vmul.f32 %v604, %v604
    %v659 = vmul.f32 %v605, %v605
    %v660 = vmul.f32 %v606, %v606
    %v661 = vmul.f32 %v607, %v607
    %v662 = vmul.f32 %v608, %v608
    %v663 = vmul.f32 %v609, %v609
    %v664 = vmul.f32 %v610, %v610
    %v665 = vmul.f32 %v611, %v611
    %v666 = vmul.f32 %v612, %v612
    %v667 = vmul.f32 %v613, %v613
    %v668 = vmul.f32 %v614, %v614
    %v669 = vmul.f32 %v615, %v615
    %v670 = vmul.f32 %v616, %v616
    %v671 = vmul.f32 %v617, %v617
    %v672 = vmul.f32 %v618, %v618
    %v673 = vmul.f32 %v619, %v619
    %v674 = vmul.f32 %v620, %v620
    %v675 = vmul.f32 %v621, %v621
    %v676 = vmul.f32 %v622, %v622
    %v677 = vmul.f32 %v623, %v623
    %v678 = vmul.f32 %v624, %v624
    %v679 = vmul.f32 %v625, %v625
    %v680 = vmul.f32 %v626, %v626
    %v681 = vmul.f32 %v627, %v627
    %v682 = vmul.f32 %v628, %v628
    %v683 = vmul.f32 %v629, %v629
    %v684 = vmul.f32 %v630, %v630
    %v685 = vmul.f32 %v631, %v631
    %v686 = vmul.f32 %v632, %v632
    %v687 = vmul.f32 %v633, %v633
    %v688 = vmul.f32 %v634, %v634
    %v689 = vmul.f32 %v635, %v635
    %v690 = vmul.f32 %v636, %v636
    %v691 = vmul.f32 %v637, %v637
    %v692 = vmul.f32 %v638, %v638
    %v693 = vmul.f32 %v639, %v639
    %v694 = vmul.f32 %v640, %v640
    %v695 = vmul.f32 %v641, %v641
    %v696 = vmul.f32 %v642, %v642
    %v697 = vmul.f32 %v643, %v643
    %v698 = vmul.f32 %v644, %v644
    %v699 = vmul.f32 %v645, %v645
    %v700 = vmul.f32 %v646, %v646
    %v701 = vmul.f32 %v647, %v647
    %v702 = vmul.f32 %v648, %v648
    %v703 = vmul.f32 %v649, %v649
    %v704 = vmul.f32 %v650, %v650
    %v705 = vmul.f32 %v651, %v651
    %v706 = vmul.f32 %v652, %v652
    %v707 = vmul.f32 %v653, %v653
    %v708 = vmul.f32 %v654, %v654
    %v709 = vmul.f32 %v655, %v655
    %v710 = vmul.f32 %v656, %v656
    %v711 = vmul.f32 %v657, %v657
    %v712 = vadd.f32 %v658, %v659
    %v713 = vsel %vm510, %v660, 0.0
    %v714 = vadd.f32 %v712, %v713
    %v715 = vadd.f32 %v714, %v661
    %v716 = vadd.f32 %v715, %v662
    %v717 = vsel %vm510, %v663, 0.0
    %v718 = vadd.f32 %v716, %v717
    %v719 = vsel %vm517, %v664, 0.0
    %v720 = vadd.f32 %v718, %v719
    %v721 = vsel %vm517, %v665, 0.0
    %v722 = vadd.f32 %v720, %v721
    %v723 = vsel %vm522, %v666, 0.0
    %v724 = vadd.f32 %v722, %v723
    %v725 = vadd.f32 %v724, %v667
    %v726 = vadd.f32 %v725, %v668
    %v727 = vsel %vm510, %v669, 0.0
    %v728 = vadd.f32 %v726, %v727
    %v729 = vadd.f32 %v728, %v670
    %v730 = vadd.f32 %v729, %v671
    %v731 = vsel %vm510, %v672, 0.0
    %v732 = vadd.f32 %v730, %v731
    %v733 = vsel %vm517, %v673, 0.0
    %v734 = vadd.f32 %v732, %v733
    %v735 = vsel %vm517, %v674, 0.0
    %v736 = vadd.f32 %v734, %v735
    %v737 = vsel %vm522, %v675, 0.0
    %v738 = vadd.f32 %v736, %v737
    %v739 = vadd.f32 %v738, %v676
    %v740 = vadd.f32 %v739, %v677
    %v741 = vsel %vm510, %v678, 0.0
    %v742 = vadd.f32 %v740, %v741
    %v743 = vadd.f32 %v742, %v679
    %v744 = vadd.f32 %v743, %v680
    %v745 = vsel %vm510, %v681, 0.0
    %v746 = vadd.f32 %v744, %v745
    %v747 = vsel %vm517, %v682, 0.0
    %v748 = vadd.f32 %v746, %v747
    %v749 = vsel %vm517, %v683, 0.0
    %v750 = vadd.f32 %v748, %v749
    %v751 = vsel %vm522, %v684, 0.0
    %v752 = vadd.f32 %v750, %v751
    %v753 = vadd.f32 %v752, %v685
    %v754 = vadd.f32 %v753, %v686
    %v755 = vsel %vm510, %v687, 0.0
    %v756 = vadd.f32 %v754, %v755
    %v757 = vadd.f32 %v756, %v688
    %v758 = vadd.f32 %v757, %v689
    %v759 = vsel %vm510, %v690, 0.0
    %v760 = vadd.f32 %v758, %v759
    %v761 = vsel %vm517, %v691, 0.0
    %v762 = vadd.f32 %v760, %v761
    %v763 = vsel %vm517, %v692, 0.0
    %v764 = vadd.f32 %v762, %v763
    %v765 = vsel %vm522, %v693, 0.0
    %v766 = vadd.f32 %v764, %v765
    %v767 = vadd.f32 %v766, %v694
    %v768 = vadd.f32 %v767, %v695
    %v769 = vsel %vm510, %v696, 0.0
    %v770 = vadd.f32 %v768, %v769
    %v771 = vadd.f32 %v770, %v697
    %v772 = vadd.f32 %v771, %v698
    %v773 = vsel %vm510, %v699, 0.0
    %v774 = vadd.f32 %v772, %v773
    %v775 = vsel %vm517, %v700, 0.0
    %v776 = vadd.f32 %v774, %v775
    %v777 = vsel %vm517, %v701, 0.0
    %v778 = vadd.f32 %v776, %v777
    %v779 = vsel %vm522, %v702, 0.0
    %v780 = vadd.f32 %v778, %v779
    %v781 = vadd.f32 %v780, %v703
    %v782 = vadd.f32 %v781, %v704
    %v783 = vsel %vm510, %v705, 0.0
    %v784 = vadd.f32 %v782, %v783
    %v785 = vadd.f32 %v784, %v706
    %v786 = vadd.f32 %v785, %v707
    %v787 = vsel %vm510, %v708, 0.0
    %v788 = vadd.f32 %v786, %v787
    %v789 = vsel %vm517, %v709, 0.0
    %v790 = vadd.f32 %v788, %v789
    %v791 = vsel %vm517, %v710, 0.0
    %v792 = vadd.f32 %v790, %v791
    %v793 = vsel %vm522, %v711, 0.0
    %v794 = vadd.f32 %v792, %v793
    %795 = vadd.xlane.f32.xlu0 %v794
    %v796 = vpop.xlane.xlu0 %795
    %v797 = vrot.slane %v796, 4
    %v798 = vadd.f32 %v796, %v797
    %v799 = vrot.slane %v798, 2
    %v800 = vadd.f32 %v798, %v799
    %v801 = vrot.slane %v800, 1
    %v802 = vadd.f32 %v800, %v801
    %s803 = vtos %v802
    %804 = vrot.lane.b32.xlu0 %v23, 111
    %v805 = vpop.permute.xlu0 %804
    %806 = vrot.lane.b32.xlu0 %v24, 111
    %v807 = vpop.permute.xlu0 %806
    %808 = vrot.lane.b32.xlu0 %v25, 111
    %v809 = vpop.permute.xlu0 %808
    %810 = vrot.lane.b32.xlu0 %v26, 111
    %v811 = vpop.permute.xlu0 %810
    %812 = vrot.lane.b32.xlu0 %v27, 111
    %v813 = vpop.permute.xlu0 %812
    %814 = vrot.lane.b32.xlu0 %v28, 111
    %v815 = vpop.permute.xlu0 %814
    %816 = vrot.lane.b32.xlu0 %v29, 111
    %v817 = vpop.permute.xlu0 %816
    %818 = vrot.lane.b32.xlu0 %v30, 111
    %v819 = vpop.permute.xlu0 %818
    %820 = vrot.lane.b32.xlu0 %v31, 111
    %v821 = vpop.permute.xlu0 %820
    %822 = vrot.lane.b32.xlu0 %v32, 111
    %v823 = vpop.permute.xlu0 %822
    %824 = vrot.lane.b32.xlu0 %v33, 111
    %v825 = vpop.permute.xlu0 %824
    %826 = vrot.lane.b32.xlu0 %v34, 111
    %v827 = vpop.permute.xlu0 %826
    %828 = vrot.lane.b32.xlu0 %v35, 111
    %v829 = vpop.permute.xlu0 %828
    %830 = vrot.lane.b32.xlu0 %v36, 111
    %v831 = vpop.permute.xlu0 %830
    %832 = vrot.lane.b32.xlu0 %v37, 111
    %v833 = vpop.permute.xlu0 %832
    %834 = vrot.lane.b32.xlu0 %v38, 111
    %v835 = vpop.permute.xlu0 %834
    %836 = vrot.lane.b32.xlu0 %v39, 111
    %v837 = vpop.permute.xlu0 %836
    %838 = vrot.lane.b32.xlu0 %v40, 111
    %v839 = vpop.permute.xlu0 %838
    %840 = vrot.lane.b32.xlu0 %v41, 111
    %v841 = vpop.permute.xlu0 %840
    %842 = vrot.lane.b32.xlu0 %v42, 111
    %v843 = vpop.permute.xlu0 %842
    %844 = vrot.lane.b32.xlu0 %v43, 111
    %v845 = vpop.permute.xlu0 %844
    %846 = vrot.lane.b32.xlu0 %v44, 111
    %v847 = vpop.permute.xlu0 %846
    %848 = vrot.lane.b32.xlu0 %v45, 111
    %v849 = vpop.permute.xlu0 %848
    %850 = vrot.lane.b32.xlu0 %v46, 111
    %v851 = vpop.permute.xlu0 %850
    %852 = vrot.lane.b32.xlu0 %v47, 111
    %v853 = vpop.permute.xlu0 %852
    %854 = vrot.lane.b32.xlu0 %v48, 111
    %v855 = vpop.permute.xlu0 %854
    %856 = vrot.lane.b32.xlu0 %v49, 111
    %v857 = vpop.permute.xlu0 %856
    %858 = vrot.lane.b32.xlu0 %v50, 111
    %v859 = vpop.permute.xlu0 %858
    %860 = vrot.lane.b32.xlu0 %v51, 111
    %v861 = vpop.permute.xlu0 %860
    %862 = vrot.lane.b32.xlu0 %v52, 111
    %v863 = vpop.permute.xlu0 %862
    %864 = vrot.lane.b32.xlu0 %v53, 111
    %v865 = vpop.permute.xlu0 %864
    %866 = vrot.lane.b32.xlu0 %v54, 111
    %v867 = vpop.permute.xlu0 %866
    %868 = vrot.lane.b32.xlu0 %v55, 111
    %v869 = vpop.permute.xlu0 %868
    %870 = vrot.lane.b32.xlu0 %v56, 111
    %v871 = vpop.permute.xlu0 %870
    %872 = vrot.lane.b32.xlu0 %v57, 111
    %v873 = vpop.permute.xlu0 %872
    %874 = vrot.lane.b32.xlu0 %v58, 111
    %v875 = vpop.permute.xlu0 %874
    %876 = vrot.lane.b32.xlu0 %v59, 111
    %v877 = vpop.permute.xlu0 %876
    %878 = vrot.lane.b32.xlu0 %v60, 111
    %v879 = vpop.permute.xlu0 %878
    %880 = vrot.lane.b32.xlu0 %v61, 111
    %v881 = vpop.permute.xlu0 %880
    %882 = vrot.lane.b32.xlu0 %v62, 111
    %v883 = vpop.permute.xlu0 %882
    %884 = vrot.lane.b32.xlu0 %v63, 111
    %v885 = vpop.permute.xlu0 %884
    %886 = vrot.lane.b32.xlu0 %v64, 111
    %v887 = vpop.permute.xlu0 %886
    %888 = vrot.lane.b32.xlu0 %v65, 111
    %v889 = vpop.permute.xlu0 %888
    %890 = vrot.lane.b32.xlu0 %v66, 111
    %v891 = vpop.permute.xlu0 %890
    %892 = vrot.lane.b32.xlu0 %v67, 111
    %v893 = vpop.permute.xlu0 %892
    %894 = vrot.lane.b32.xlu0 %v68, 111
    %v895 = vpop.permute.xlu0 %894
    %896 = vrot.lane.b32.xlu0 %v69, 111
    %v897 = vpop.permute.xlu0 %896
    %898 = vrot.lane.b32.xlu0 %v70, 111
    %v899 = vpop.permute.xlu0 %898
    %900 = vrot.lane.b32.xlu0 %v71, 111
    %v901 = vpop.permute.xlu0 %900
    %902 = vrot.lane.b32.xlu0 %v72, 111
    %v903 = vpop.permute.xlu0 %902
    %904 = vrot.lane.b32.xlu0 %v73, 111
    %v905 = vpop.permute.xlu0 %904
    %906 = vrot.lane.b32.xlu0 %v74, 111
    %v907 = vpop.permute.xlu0 %906
    %908 = vrot.lane.b32.xlu0 %v75, 111
    %v909 = vpop.permute.xlu0 %908
    %910 = vrot.lane.b32.xlu0 %v76, 111
    %v911 = vpop.permute.xlu0 %910
    %vm912 = vcmask 908288
    %v913 = vsel %vm912, %v805, %v807
    %v914 = vsel %vm912, %v807, %v809
    %v915 = vsel %vm912, %v811, %v813
    %v916 = vsel %vm912, %v813, %v815
    %v917 = vsel %vm912, %v817, %v819
    %v918 = vsel %vm912, %v819, %v821
    %v919 = vsel %vm912, %v823, %v825
    %v920 = vsel %vm912, %v825, %v827
    %v921 = vsel %vm912, %v829, %v831
    %v922 = vsel %vm912, %v831, %v833
    %v923 = vsel %vm912, %v835, %v837
    %v924 = vsel %vm912, %v837, %v839
    %v925 = vsel %vm912, %v841, %v843
    %v926 = vsel %vm912, %v843, %v845
    %v927 = vsel %vm912, %v847, %v849
    %v928 = vsel %vm912, %v849, %v851
    %v929 = vsel %vm912, %v853, %v855
    %v930 = vsel %vm912, %v855, %v857
    %v931 = vsel %vm912, %v859, %v861
    %v932 = vsel %vm912, %v861, %v863
    %v933 = vsel %vm912, %v865, %v867
    %v934 = vsel %vm912, %v867, %v869
    %v935 = vsel %vm912, %v871, %v873
    %v936 = vsel %vm912, %v873, %v875
    %v937 = vsel %vm912, %v877, %v879
    %v938 = vsel %vm912, %v879, %v881
    %v939 = vsel %vm912, %v883, %v885
    %v940 = vsel %vm912, %v885, %v887
    %v941 = vsel %vm912, %v889, %v891
    %v942 = vsel %vm912, %v891, %v893
    %v943 = vsel %vm912, %v895, %v897
    %v944 = vsel %vm912, %v897, %v899
    %v945 = vsel %vm912, %v901, %v903
    %v946 = vsel %vm912, %v903, %v905
    %v947 = vsel %vm912, %v907, %v909
    %v948 = vsel %vm912, %v909, %v911
    %v1003 = vsub.f32 %v23, %v913
    %v1004 = vsub.f32 %v24, %v914
    %v1005 = vsub.f32 %v25, %v809
    %v1006 = vsub.f32 %v26, %v915
    %v1007 = vsub.f32 %v27, %v916
    %v1008 = vsub.f32 %v28, %v815
    %v1009 = vsub.f32 %v29, %v917
    %v1010 = vsub.f32 %v30, %v918
    %v1011 = vsub.f32 %v31, %v821
    %v1012 = vsub.f32 %v32, %v919
    %v1013 = vsub.f32 %v33, %v920
    %v1014 = vsub.f32 %v34, %v827
    %v1015 = vsub.f32 %v35, %v921
    %v1016 = vsub.f32 %v36, %v922
    %v1017 = vsub.f32 %v37, %v833
    %v1018 = vsub.f32 %v38, %v923
    %v1019 = vsub.f32 %v39, %v924
    %v1020 = vsub.f32 %v40, %v839
    %v1021 = vsub.f32 %v41, %v925
    %v1022 = vsub.f32 %v42, %v926
    %v1023 = vsub.f32 %v43, %v845
    %v1024 = vsub.f32 %v44, %v927
    %v1025 = vsub.f32 %v45, %v928
    %v1026 = vsub.f32 %v46, %v851
    %v1027 = vsub.f32 %v47, %v929
    %v1028 = vsub.f32 %v48, %v930
    %v1029 = vsub.f32 %v49, %v857
    %v1030 = vsub.f32 %v50, %v931
    %v1031 = vsub.f32 %v51, %v932
    %v1032 = vsub.f32 %v52, %v863
    %v1033 = vsub.f32 %v53, %v933
    %v1034 = vsub.f32 %v54, %v934
    %v1035 = vsub.f32 %v55, %v869
    %v1036 = vsub.f32 %v56, %v935
    %v1037 = vsub.f32 %v57, %v936
    %v1038 = vsub.f32 %v58, %v875
    %v1039 = vsub.f32 %v59, %v937
    %v1040 = vsub.f32 %v60, %v938
    %v1041 = vsub.f32 %v61, %v881
    %v1042 = vsub.f32 %v62, %v939
    %v1043 = vsub.f32 %v63, %v940
    %v1044 = vsub.f32 %v64, %v887
    %v1045 = vsub.f32 %v65, %v941
    %v1046 = vsub.f32 %v66, %v942
    %v1047 = vsub.f32 %v67, %v893
    %v1048 = vsub.f32 %v68, %v943
    %v1049 = vsub.f32 %v69, %v944
    %v1050 = vsub.f32 %v70, %v899
    %v1051 = vsub.f32 %v71, %v945
    %v1052 = vsub.f32 %v72, %v946
    %v1053 = vsub.f32 %v73, %v905
    %v1054 = vsub.f32 %v74, %v947
    %v1055 = vsub.f32 %v75, %v948
    %v1056 = vsub.f32 %v76, %v911
    %v1057 = vld [vmem:[%s2] sm:$0x7]
    %v1059 = vlaneseq
    %v1060 = vshrl.u32 %v1059, 7
    %v1061 = vsub.s32 0, %v1060
    %v1062 = vrot.slane %v1057, %v1061
    %v1063 = vlaneseq
    %v1064 = vshrl.u32 %v1063, 7
    %v1065 = vsub.s32 1, %v1064
    %v1066 = vrot.slane %v1057, %v1065
    %v1067 = vlaneseq
    %v1068 = vshrl.u32 %v1067, 7
    %v1069 = vsub.s32 2, %v1068
    %v1070 = vrot.slane %v1057, %v1069
    %v1074 = vmul.f32 %v1003, %v1062
    %v1075 = vmul.f32 %v1004, %v1066
    %v1076 = vmul.f32 %v1005, %v1070
    %v1077 = vmul.f32 %v1006, %v1062
    %v1078 = vmul.f32 %v1007, %v1066
    %v1079 = vmul.f32 %v1008, %v1070
    %v1080 = vmul.f32 %v1009, %v1062
    %v1081 = vmul.f32 %v1010, %v1066
    %v1082 = vmul.f32 %v1011, %v1070
    %v1083 = vmul.f32 %v1012, %v1062
    %v1084 = vmul.f32 %v1013, %v1066
    %v1085 = vmul.f32 %v1014, %v1070
    %v1086 = vmul.f32 %v1015, %v1062
    %v1087 = vmul.f32 %v1016, %v1066
    %v1088 = vmul.f32 %v1017, %v1070
    %v1089 = vmul.f32 %v1018, %v1062
    %v1090 = vmul.f32 %v1019, %v1066
    %v1091 = vmul.f32 %v1020, %v1070
    %v1092 = vmul.f32 %v1021, %v1062
    %v1093 = vmul.f32 %v1022, %v1066
    %v1094 = vmul.f32 %v1023, %v1070
    %v1095 = vmul.f32 %v1024, %v1062
    %v1096 = vmul.f32 %v1025, %v1066
    %v1097 = vmul.f32 %v1026, %v1070
    %v1098 = vmul.f32 %v1027, %v1062
    %v1099 = vmul.f32 %v1028, %v1066
    %v1100 = vmul.f32 %v1029, %v1070
    %v1101 = vmul.f32 %v1030, %v1062
    %v1102 = vmul.f32 %v1031, %v1066
    %v1103 = vmul.f32 %v1032, %v1070
    %v1104 = vmul.f32 %v1033, %v1062
    %v1105 = vmul.f32 %v1034, %v1066
    %v1106 = vmul.f32 %v1035, %v1070
    %v1107 = vmul.f32 %v1036, %v1062
    %v1108 = vmul.f32 %v1037, %v1066
    %v1109 = vmul.f32 %v1038, %v1070
    %v1110 = vmul.f32 %v1039, %v1062
    %v1111 = vmul.f32 %v1040, %v1066
    %v1112 = vmul.f32 %v1041, %v1070
    %v1113 = vmul.f32 %v1042, %v1062
    %v1114 = vmul.f32 %v1043, %v1066
    %v1115 = vmul.f32 %v1044, %v1070
    %v1116 = vmul.f32 %v1045, %v1062
    %v1117 = vmul.f32 %v1046, %v1066
    %v1118 = vmul.f32 %v1047, %v1070
    %v1119 = vmul.f32 %v1048, %v1062
    %v1120 = vmul.f32 %v1049, %v1066
    %v1121 = vmul.f32 %v1050, %v1070
    %v1122 = vmul.f32 %v1051, %v1062
    %v1123 = vmul.f32 %v1052, %v1066
    %v1124 = vmul.f32 %v1053, %v1070
    %v1125 = vmul.f32 %v1054, %v1062
    %v1126 = vmul.f32 %v1055, %v1066
    %v1127 = vmul.f32 %v1056, %v1070
    %v1128 = vmul.f32 %v1074, %v1003
    %v1129 = vmul.f32 %v1075, %v1004
    %v1130 = vmul.f32 %v1076, %v1005
    %v1131 = vmul.f32 %v1077, %v1006
    %v1132 = vmul.f32 %v1078, %v1007
    %v1133 = vmul.f32 %v1079, %v1008
    %v1134 = vmul.f32 %v1080, %v1009
    %v1135 = vmul.f32 %v1081, %v1010
    %v1136 = vmul.f32 %v1082, %v1011
    %v1137 = vmul.f32 %v1083, %v1012
    %v1138 = vmul.f32 %v1084, %v1013
    %v1139 = vmul.f32 %v1085, %v1014
    %v1140 = vmul.f32 %v1086, %v1015
    %v1141 = vmul.f32 %v1087, %v1016
    %v1142 = vmul.f32 %v1088, %v1017
    %v1143 = vmul.f32 %v1089, %v1018
    %v1144 = vmul.f32 %v1090, %v1019
    %v1145 = vmul.f32 %v1091, %v1020
    %v1146 = vmul.f32 %v1092, %v1021
    %v1147 = vmul.f32 %v1093, %v1022
    %v1148 = vmul.f32 %v1094, %v1023
    %v1149 = vmul.f32 %v1095, %v1024
    %v1150 = vmul.f32 %v1096, %v1025
    %v1151 = vmul.f32 %v1097, %v1026
    %v1152 = vmul.f32 %v1098, %v1027
    %v1153 = vmul.f32 %v1099, %v1028
    %v1154 = vmul.f32 %v1100, %v1029
    %v1155 = vmul.f32 %v1101, %v1030
    %v1156 = vmul.f32 %v1102, %v1031
    %v1157 = vmul.f32 %v1103, %v1032
    %v1158 = vmul.f32 %v1104, %v1033
    %v1159 = vmul.f32 %v1105, %v1034
    %v1160 = vmul.f32 %v1106, %v1035
    %v1161 = vmul.f32 %v1107, %v1036
    %v1162 = vmul.f32 %v1108, %v1037
    %v1163 = vmul.f32 %v1109, %v1038
    %v1164 = vmul.f32 %v1110, %v1039
    %v1165 = vmul.f32 %v1111, %v1040
    %v1166 = vmul.f32 %v1112, %v1041
    %v1167 = vmul.f32 %v1113, %v1042
    %v1168 = vmul.f32 %v1114, %v1043
    %v1169 = vmul.f32 %v1115, %v1044
    %v1170 = vmul.f32 %v1116, %v1045
    %v1171 = vmul.f32 %v1117, %v1046
    %v1172 = vmul.f32 %v1118, %v1047
    %v1173 = vmul.f32 %v1119, %v1048
    %v1174 = vmul.f32 %v1120, %v1049
    %v1175 = vmul.f32 %v1121, %v1050
    %v1176 = vmul.f32 %v1122, %v1051
    %v1177 = vmul.f32 %v1123, %v1052
    %v1178 = vmul.f32 %v1124, %v1053
    %v1179 = vmul.f32 %v1125, %v1054
    %v1180 = vmul.f32 %v1126, %v1055
    %v1181 = vmul.f32 %v1127, %v1056
    %v1182 = vadd.f32 %v1128, %v1129
    %vm1183 = vcmask 130048
    %v1184 = vsel %vm1183, %v1130, 0.0
    %v1185 = vadd.f32 %v1182, %v1184
    %v1186 = vadd.f32 %v1185, %v1131
    %v1187 = vadd.f32 %v1186, %v1132
    %v1188 = vsel %vm1183, %v1133, 0.0
    %v1189 = vadd.f32 %v1187, %v1188
    %v1190 = vsel %vm517, %v1134, 0.0
    %v1191 = vadd.f32 %v1189, %v1190
    %v1192 = vsel %vm517, %v1135, 0.0
    %v1193 = vadd.f32 %v1191, %v1192
    %vm1194 = vcmask 122880
    %v1195 = vsel %vm1194, %v1136, 0.0
    %v1196 = vadd.f32 %v1193, %v1195
    %v1197 = vadd.f32 %v1196, %v1137
    %v1198 = vadd.f32 %v1197, %v1138
    %v1199 = vsel %vm1183, %v1139, 0.0
    %v1200 = vadd.f32 %v1198, %v1199
    %v1201 = vadd.f32 %v1200, %v1140
    %v1202 = vadd.f32 %v1201, %v1141
    %v1203 = vsel %vm1183, %v1142, 0.0
    %v1204 = vadd.f32 %v1202, %v1203
    %v1205 = vsel %vm517, %v1143, 0.0
    %v1206 = vadd.f32 %v1204, %v1205
    %v1207 = vsel %vm517, %v1144, 0.0
    %v1208 = vadd.f32 %v1206, %v1207
    %v1209 = vsel %vm1194, %v1145, 0.0
    %v1210 = vadd.f32 %v1208, %v1209
    %v1211 = vadd.f32 %v1210, %v1146
    %v1212 = vadd.f32 %v1211, %v1147
    %v1213 = vsel %vm1183, %v1148, 0.0
    %v1214 = vadd.f32 %v1212, %v1213
    %v1215 = vadd.f32 %v1214, %v1149
    %v1216 = vadd.f32 %v1215, %v1150
    %v1217 = vsel %vm1183, %v1151, 0.0
    %v1218 = vadd.f32 %v1216, %v1217
    %v1219 = vsel %vm517, %v1152, 0.0
    %v1220 = vadd.f32 %v1218, %v1219
    %v1221 = vsel %vm517, %v1153, 0.0
    %v1222 = vadd.f32 %v1220, %v1221
    %v1223 = vsel %vm1194, %v1154, 0.0
    %v1224 = vadd.f32 %v1222, %v1223
    %v1225 = vadd.f32 %v1224, %v1155
    %v1226 = vadd.f32 %v1225, %v1156
    %v1227 = vsel %vm1183, %v1157, 0.0
    %v1228 = vadd.f32 %v1226, %v1227
    %v1229 = vadd.f32 %v1228, %v1158
    %v1230 = vadd.f32 %v1229, %v1159
    %v1231 = vsel %vm1183, %v1160, 0.0
    %v1232 = vadd.f32 %v1230, %v1231
    %v1233 = vsel %vm517, %v1161, 0.0
    %v1234 = vadd.f32 %v1232, %v1233
    %v1235 = vsel %vm517, %v1162, 0.0
    %v1236 = vadd.f32 %v1234, %v1235
    %v1237 = vsel %vm1194, %v1163, 0.0
    %v1238 = vadd.f32 %v1236, %v1237
    %v1239 = vadd.f32 %v1238, %v1164
    %v1240 = vadd.f32 %v1239, %v1165
    %v1241 = vsel %vm1183, %v1166, 0.0
    %v1242 = vadd.f32 %v1240, %v1241
    %v1243 = vadd.f32 %v1242, %v1167
    %v1244 = vadd.f32 %v1243, %v1168
    %v1245 = vsel %vm1183, %v1169, 0.0
    %v1246 = vadd.f32 %v1244, %v1245
    %v1247 = vsel %vm517, %v1170, 0.0
    %v1248 = vadd.f32 %v1246, %v1247
    %v1249 = vsel %vm517, %v1171, 0.0
    %v1250 = vadd.f32 %v1248, %v1249
    %v1251 = vsel %vm1194, %v1172, 0.0
    %v1252 = vadd.f32 %v1250, %v1251
    %v1253 = vadd.f32 %v1252, %v1173
    %v1254 = vadd.f32 %v1253, %v1174
    %v1255 = vsel %vm1183, %v1175, 0.0
    %v1256 = vadd.f32 %v1254, %v1255
    %v1257 = vadd.f32 %v1256, %v1176
    %v1258 = vadd.f32 %v1257, %v1177
    %v1259 = vsel %vm1183, %v1178, 0.0
    %v1260 = vadd.f32 %v1258, %v1259
    %v1261 = vsel %vm517, %v1179, 0.0
    %v1262 = vadd.f32 %v1260, %v1261
    %v1263 = vsel %vm517, %v1180, 0.0
    %v1264 = vadd.f32 %v1262, %v1263
    %v1265 = vsel %vm1194, %v1181, 0.0
    %v1266 = vadd.f32 %v1264, %v1265
    %1267 = vadd.xlane.f32.xlu0 %v1266
    %v1268 = vpop.xlane.xlu0 %1267
    %v1269 = vrot.slane %v1268, 4
    %v1270 = vadd.f32 %v1268, %v1269
    %v1271 = vrot.slane %v1270, 2
    %v1272 = vadd.f32 %v1270, %v1271
    %v1273 = vrot.slane %v1272, 1
    %v1274 = vadd.f32 %v1272, %v1273
    %s1275 = vtos %v1274
    %s1276 = sadd.f32 %s603, %s1275
    %v1277 = vmax.f32 %v1074, 0.0
    %v1278 = vmax.f32 %v1075, 0.0
    %v1279 = vmax.f32 %v1076, 0.0
    %v1280 = vmax.f32 %v1077, 0.0
    %v1281 = vmax.f32 %v1078, 0.0
    %v1282 = vmax.f32 %v1079, 0.0
    %v1283 = vmax.f32 %v1080, 0.0
    %v1284 = vmax.f32 %v1081, 0.0
    %v1285 = vmax.f32 %v1082, 0.0
    %v1286 = vmax.f32 %v1083, 0.0
    %v1287 = vmax.f32 %v1084, 0.0
    %v1288 = vmax.f32 %v1085, 0.0
    %v1289 = vmax.f32 %v1086, 0.0
    %v1290 = vmax.f32 %v1087, 0.0
    %v1291 = vmax.f32 %v1088, 0.0
    %v1292 = vmax.f32 %v1089, 0.0
    %v1293 = vmax.f32 %v1090, 0.0
    %v1294 = vmax.f32 %v1091, 0.0
    %v1295 = vmax.f32 %v1092, 0.0
    %v1296 = vmax.f32 %v1093, 0.0
    %v1297 = vmax.f32 %v1094, 0.0
    %v1298 = vmax.f32 %v1095, 0.0
    %v1299 = vmax.f32 %v1096, 0.0
    %v1300 = vmax.f32 %v1097, 0.0
    %v1301 = vmax.f32 %v1098, 0.0
    %v1302 = vmax.f32 %v1099, 0.0
    %v1303 = vmax.f32 %v1100, 0.0
    %v1304 = vmax.f32 %v1101, 0.0
    %v1305 = vmax.f32 %v1102, 0.0
    %v1306 = vmax.f32 %v1103, 0.0
    %v1307 = vmax.f32 %v1104, 0.0
    %v1308 = vmax.f32 %v1105, 0.0
    %v1309 = vmax.f32 %v1106, 0.0
    %v1310 = vmax.f32 %v1107, 0.0
    %v1311 = vmax.f32 %v1108, 0.0
    %v1312 = vmax.f32 %v1109, 0.0
    %v1313 = vmax.f32 %v1110, 0.0
    %v1314 = vmax.f32 %v1111, 0.0
    %v1315 = vmax.f32 %v1112, 0.0
    %v1316 = vmax.f32 %v1113, 0.0
    %v1317 = vmax.f32 %v1114, 0.0
    %v1318 = vmax.f32 %v1115, 0.0
    %v1319 = vmax.f32 %v1116, 0.0
    %v1320 = vmax.f32 %v1117, 0.0
    %v1321 = vmax.f32 %v1118, 0.0
    %v1322 = vmax.f32 %v1119, 0.0
    %v1323 = vmax.f32 %v1120, 0.0
    %v1324 = vmax.f32 %v1121, 0.0
    %v1325 = vmax.f32 %v1122, 0.0
    %v1326 = vmax.f32 %v1123, 0.0
    %v1327 = vmax.f32 %v1124, 0.0
    %v1328 = vmax.f32 %v1125, 0.0
    %v1329 = vmax.f32 %v1126, 0.0
    %v1330 = vmax.f32 %v1127, 0.0
    %v1331 = vmul.f32 %v1277, %v1277
    %v1332 = vmul.f32 %v1278, %v1278
    %v1333 = vmul.f32 %v1279, %v1279
    %v1334 = vmul.f32 %v1280, %v1280
    %v1335 = vmul.f32 %v1281, %v1281
    %v1336 = vmul.f32 %v1282, %v1282
    %v1337 = vmul.f32 %v1283, %v1283
    %v1338 = vmul.f32 %v1284, %v1284
    %v1339 = vmul.f32 %v1285, %v1285
    %v1340 = vmul.f32 %v1286, %v1286
    %v1341 = vmul.f32 %v1287, %v1287
    %v1342 = vmul.f32 %v1288, %v1288
    %v1343 = vmul.f32 %v1289, %v1289
    %v1344 = vmul.f32 %v1290, %v1290
    %v1345 = vmul.f32 %v1291, %v1291
    %v1346 = vmul.f32 %v1292, %v1292
    %v1347 = vmul.f32 %v1293, %v1293
    %v1348 = vmul.f32 %v1294, %v1294
    %v1349 = vmul.f32 %v1295, %v1295
    %v1350 = vmul.f32 %v1296, %v1296
    %v1351 = vmul.f32 %v1297, %v1297
    %v1352 = vmul.f32 %v1298, %v1298
    %v1353 = vmul.f32 %v1299, %v1299
    %v1354 = vmul.f32 %v1300, %v1300
    %v1355 = vmul.f32 %v1301, %v1301
    %v1356 = vmul.f32 %v1302, %v1302
    %v1357 = vmul.f32 %v1303, %v1303
    %v1358 = vmul.f32 %v1304, %v1304
    %v1359 = vmul.f32 %v1305, %v1305
    %v1360 = vmul.f32 %v1306, %v1306
    %v1361 = vmul.f32 %v1307, %v1307
    %v1362 = vmul.f32 %v1308, %v1308
    %v1363 = vmul.f32 %v1309, %v1309
    %v1364 = vmul.f32 %v1310, %v1310
    %v1365 = vmul.f32 %v1311, %v1311
    %v1366 = vmul.f32 %v1312, %v1312
    %v1367 = vmul.f32 %v1313, %v1313
    %v1368 = vmul.f32 %v1314, %v1314
    %v1369 = vmul.f32 %v1315, %v1315
    %v1370 = vmul.f32 %v1316, %v1316
    %v1371 = vmul.f32 %v1317, %v1317
    %v1372 = vmul.f32 %v1318, %v1318
    %v1373 = vmul.f32 %v1319, %v1319
    %v1374 = vmul.f32 %v1320, %v1320
    %v1375 = vmul.f32 %v1321, %v1321
    %v1376 = vmul.f32 %v1322, %v1322
    %v1377 = vmul.f32 %v1323, %v1323
    %v1378 = vmul.f32 %v1324, %v1324
    %v1379 = vmul.f32 %v1325, %v1325
    %v1380 = vmul.f32 %v1326, %v1326
    %v1381 = vmul.f32 %v1327, %v1327
    %v1382 = vmul.f32 %v1328, %v1328
    %v1383 = vmul.f32 %v1329, %v1329
    %v1384 = vmul.f32 %v1330, %v1330
    %v1385 = vadd.f32 %v1331, %v1332
    %v1386 = vsel %vm1183, %v1333, 0.0
    %v1387 = vadd.f32 %v1385, %v1386
    %v1388 = vadd.f32 %v1387, %v1334
    %v1389 = vadd.f32 %v1388, %v1335
    %v1390 = vsel %vm1183, %v1336, 0.0
    %v1391 = vadd.f32 %v1389, %v1390
    %v1392 = vsel %vm517, %v1337, 0.0
    %v1393 = vadd.f32 %v1391, %v1392
    %v1394 = vsel %vm517, %v1338, 0.0
    %v1395 = vadd.f32 %v1393, %v1394
    %v1396 = vsel %vm1194, %v1339, 0.0
    %v1397 = vadd.f32 %v1395, %v1396
    %v1398 = vadd.f32 %v1397, %v1340
    %v1399 = vadd.f32 %v1398, %v1341
    %v1400 = vsel %vm1183, %v1342, 0.0
    %v1401 = vadd.f32 %v1399, %v1400
    %v1402 = vadd.f32 %v1401, %v1343
    %v1403 = vadd.f32 %v1402, %v1344
    %v1404 = vsel %vm1183, %v1345, 0.0
    %v1405 = vadd.f32 %v1403, %v1404
    %v1406 = vsel %vm517, %v1346, 0.0
    %v1407 = vadd.f32 %v1405, %v1406
    %v1408 = vsel %vm517, %v1347, 0.0
    %v1409 = vadd.f32 %v1407, %v1408
    %v1410 = vsel %vm1194, %v1348, 0.0
    %v1411 = vadd.f32 %v1409, %v1410
    %v1412 = vadd.f32 %v1411, %v1349
    %v1413 = vadd.f32 %v1412, %v1350
    %v1414 = vsel %vm1183, %v1351, 0.0
    %v1415 = vadd.f32 %v1413, %v1414
    %v1416 = vadd.f32 %v1415, %v1352
    %v1417 = vadd.f32 %v1416, %v1353
    %v1418 = vsel %vm1183, %v1354, 0.0
    %v1419 = vadd.f32 %v1417, %v1418
    %v1420 = vsel %vm517, %v1355, 0.0
    %v1421 = vadd.f32 %v1419, %v1420
    %v1422 = vsel %vm517, %v1356, 0.0
    %v1423 = vadd.f32 %v1421, %v1422
    %v1424 = vsel %vm1194, %v1357, 0.0
    %v1425 = vadd.f32 %v1423, %v1424
    %v1426 = vadd.f32 %v1425, %v1358
    %v1427 = vadd.f32 %v1426, %v1359
    %v1428 = vsel %vm1183, %v1360, 0.0
    %v1429 = vadd.f32 %v1427, %v1428
    %v1430 = vadd.f32 %v1429, %v1361
    %v1431 = vadd.f32 %v1430, %v1362
    %v1432 = vsel %vm1183, %v1363, 0.0
    %v1433 = vadd.f32 %v1431, %v1432
    %v1434 = vsel %vm517, %v1364, 0.0
    %v1435 = vadd.f32 %v1433, %v1434
    %v1436 = vsel %vm517, %v1365, 0.0
    %v1437 = vadd.f32 %v1435, %v1436
    %v1438 = vsel %vm1194, %v1366, 0.0
    %v1439 = vadd.f32 %v1437, %v1438
    %v1440 = vadd.f32 %v1439, %v1367
    %v1441 = vadd.f32 %v1440, %v1368
    %v1442 = vsel %vm1183, %v1369, 0.0
    %v1443 = vadd.f32 %v1441, %v1442
    %v1444 = vadd.f32 %v1443, %v1370
    %v1445 = vadd.f32 %v1444, %v1371
    %v1446 = vsel %vm1183, %v1372, 0.0
    %v1447 = vadd.f32 %v1445, %v1446
    %v1448 = vsel %vm517, %v1373, 0.0
    %v1449 = vadd.f32 %v1447, %v1448
    %v1450 = vsel %vm517, %v1374, 0.0
    %v1451 = vadd.f32 %v1449, %v1450
    %v1452 = vsel %vm1194, %v1375, 0.0
    %v1453 = vadd.f32 %v1451, %v1452
    %v1454 = vadd.f32 %v1453, %v1376
    %v1455 = vadd.f32 %v1454, %v1377
    %v1456 = vsel %vm1183, %v1378, 0.0
    %v1457 = vadd.f32 %v1455, %v1456
    %v1458 = vadd.f32 %v1457, %v1379
    %v1459 = vadd.f32 %v1458, %v1380
    %v1460 = vsel %vm1183, %v1381, 0.0
    %v1461 = vadd.f32 %v1459, %v1460
    %v1462 = vsel %vm517, %v1382, 0.0
    %v1463 = vadd.f32 %v1461, %v1462
    %v1464 = vsel %vm517, %v1383, 0.0
    %v1465 = vadd.f32 %v1463, %v1464
    %v1466 = vsel %vm1194, %v1384, 0.0
    %v1467 = vadd.f32 %v1465, %v1466
    %1468 = vadd.xlane.f32.xlu0 %v1467
    %v1469 = vpop.xlane.xlu0 %1468
    %v1470 = vrot.slane %v1469, 4
    %v1471 = vadd.f32 %v1469, %v1470
    %v1472 = vrot.slane %v1471, 2
    %v1473 = vadd.f32 %v1471, %v1472
    %v1474 = vrot.slane %v1473, 1
    %v1475 = vadd.f32 %v1473, %v1474
    %s1476 = vtos %v1475
    %s1477 = sadd.f32 %s803, %s1476
    %vm1478 = vcmask 1046528
    %v1479 = vrot.slane %v23, 1
    %v1480 = vrot.slane %v26, 1
    %v1481 = vsel %vm1478, %v1479, %v1480
    %v1482 = vrot.slane %v24, 1
    %v1483 = vrot.slane %v27, 1
    %v1484 = vsel %vm1478, %v1482, %v1483
    %v1485 = vrot.slane %v25, 1
    %v1486 = vrot.slane %v28, 1
    %v1487 = vsel %vm1478, %v1485, %v1486
    %v1488 = vrot.slane %v29, 1
    %v1489 = vsel %vm1478, %v1480, %v1488
    %v1490 = vrot.slane %v30, 1
    %v1491 = vsel %vm1478, %v1483, %v1490
    %v1492 = vrot.slane %v31, 1
    %v1493 = vsel %vm1478, %v1486, %v1492
    %v1494 = vrot.slane %v32, 1
    %v1495 = vrot.slane %v35, 1
    %v1496 = vsel %vm1478, %v1494, %v1495
    %v1497 = vrot.slane %v33, 1
    %v1498 = vrot.slane %v36, 1
    %v1499 = vsel %vm1478, %v1497, %v1498
    %v1500 = vrot.slane %v34, 1
    %v1501 = vrot.slane %v37, 1
    %v1502 = vsel %vm1478, %v1500, %v1501
    %v1503 = vrot.slane %v38, 1
    %v1504 = vsel %vm1478, %v1495, %v1503
    %v1505 = vrot.slane %v39, 1
    %v1506 = vsel %vm1478, %v1498, %v1505
    %v1507 = vrot.slane %v40, 1
    %v1508 = vsel %vm1478, %v1501, %v1507
    %v1509 = vrot.slane %v41, 1
    %v1510 = vrot.slane %v44, 1
    %v1511 = vsel %vm1478, %v1509, %v1510
    %v1512 = vrot.slane %v42, 1
    %v1513 = vrot.slane %v45, 1
    %v1514 = vsel %vm1478, %v1512, %v1513
    %v1515 = vrot.slane %v43, 1
    %v1516 = vrot.slane %v46, 1
    %v1517 = vsel %vm1478, %v1515, %v1516
    %v1518 = vrot.slane %v47, 1
    %v1519 = vsel %vm1478, %v1510, %v1518
    %v1520 = vrot.slane %v48, 1
    %v1521 = vsel %vm1478, %v1513, %v1520
    %v1522 = vrot.slane %v49, 1
    %v1523 = vsel %vm1478, %v1516, %v1522
    %v1524 = vrot.slane %v50, 1
    %v1525 = vrot.slane %v53, 1
    %v1526 = vsel %vm1478, %v1524, %v1525
    %v1527 = vrot.slane %v51, 1
    %v1528 = vrot.slane %v54, 1
    %v1529 = vsel %vm1478, %v1527, %v1528
    %v1530 = vrot.slane %v52, 1
    %v1531 = vrot.slane %v55, 1
    %v1532 = vsel %vm1478, %v1530, %v1531
    %v1533 = vrot.slane %v56, 1
    %v1534 = vsel %vm1478, %v1525, %v1533
    %v1535 = vrot.slane %v57, 1
    %v1536 = vsel %vm1478, %v1528, %v1535
    %v1537 = vrot.slane %v58, 1
    %v1538 = vsel %vm1478, %v1531, %v1537
    %v1539 = vrot.slane %v59, 1
    %v1540 = vrot.slane %v62, 1
    %v1541 = vsel %vm1478, %v1539, %v1540
    %v1542 = vrot.slane %v60, 1
    %v1543 = vrot.slane %v63, 1
    %v1544 = vsel %vm1478, %v1542, %v1543
    %v1545 = vrot.slane %v61, 1
    %v1546 = vrot.slane %v64, 1
    %v1547 = vsel %vm1478, %v1545, %v1546
    %v1548 = vrot.slane %v65, 1
    %v1549 = vsel %vm1478, %v1540, %v1548
    %v1550 = vrot.slane %v66, 1
    %v1551 = vsel %vm1478, %v1543, %v1550
    %v1552 = vrot.slane %v67, 1
    %v1553 = vsel %vm1478, %v1546, %v1552
    %v1554 = vrot.slane %v68, 1
    %v1555 = vrot.slane %v71, 1
    %v1556 = vsel %vm1478, %v1554, %v1555
    %v1557 = vrot.slane %v69, 1
    %v1558 = vrot.slane %v72, 1
    %v1559 = vsel %vm1478, %v1557, %v1558
    %v1560 = vrot.slane %v70, 1
    %v1561 = vrot.slane %v73, 1
    %v1562 = vsel %vm1478, %v1560, %v1561
    %v1563 = vrot.slane %v74, 1
    %v1564 = vsel %vm1478, %v1555, %v1563
    %v1565 = vrot.slane %v75, 1
    %v1566 = vsel %vm1478, %v1558, %v1565
    %v1567 = vrot.slane %v76, 1
    %v1568 = vsel %vm1478, %v1561, %v1567
    %v1605 = vsub.f32 %v23, %v1481
    %v1606 = vsub.f32 %v24, %v1484
    %v1607 = vsub.f32 %v25, %v1487
    %v1608 = vsub.f32 %v26, %v1489
    %v1609 = vsub.f32 %v27, %v1491
    %v1610 = vsub.f32 %v28, %v1493
    %v1611 = vsub.f32 %v32, %v1496
    %v1612 = vsub.f32 %v33, %v1499
    %v1613 = vsub.f32 %v34, %v1502
    %v1614 = vsub.f32 %v35, %v1504
    %v1615 = vsub.f32 %v36, %v1506
    %v1616 = vsub.f32 %v37, %v1508
    %v1617 = vsub.f32 %v41, %v1511
    %v1618 = vsub.f32 %v42, %v1514
    %v1619 = vsub.f32 %v43, %v1517
    %v1620 = vsub.f32 %v44, %v1519
    %v1621 = vsub.f32 %v45, %v1521
    %v1622 = vsub.f32 %v46, %v1523
    %v1623 = vsub.f32 %v50, %v1526
    %v1624 = vsub.f32 %v51, %v1529
    %v1625 = vsub.f32 %v52, %v1532
    %v1626 = vsub.f32 %v53, %v1534
    %v1627 = vsub.f32 %v54, %v1536
    %v1628 = vsub.f32 %v55, %v1538
    %v1629 = vsub.f32 %v59, %v1541
    %v1630 = vsub.f32 %v60, %v1544
    %v1631 = vsub.f32 %v61, %v1547
    %v1632 = vsub.f32 %v62, %v1549
    %v1633 = vsub.f32 %v63, %v1551
    %v1634 = vsub.f32 %v64, %v1553
    %v1635 = vsub.f32 %v68, %v1556
    %v1636 = vsub.f32 %v69, %v1559
    %v1637 = vsub.f32 %v70, %v1562
    %v1638 = vsub.f32 %v71, %v1564
    %v1639 = vsub.f32 %v72, %v1566
    %v1640 = vsub.f32 %v73, %v1568
    %v1641 = vmax.f32 %v1605, 0.0
    %v1642 = vmax.f32 %v1606, 0.0
    %v1643 = vmax.f32 %v1607, 0.0
    %v1644 = vmax.f32 %v1608, 0.0
    %v1645 = vmax.f32 %v1609, 0.0
    %v1646 = vmax.f32 %v1610, 0.0
    %v1647 = vmax.f32 %v1611, 0.0
    %v1648 = vmax.f32 %v1612, 0.0
    %v1649 = vmax.f32 %v1613, 0.0
    %v1650 = vmax.f32 %v1614, 0.0
    %v1651 = vmax.f32 %v1615, 0.0
    %v1652 = vmax.f32 %v1616, 0.0
    %v1653 = vmax.f32 %v1617, 0.0
    %v1654 = vmax.f32 %v1618, 0.0
    %v1655 = vmax.f32 %v1619, 0.0
    %v1656 = vmax.f32 %v1620, 0.0
    %v1657 = vmax.f32 %v1621, 0.0
    %v1658 = vmax.f32 %v1622, 0.0
    %v1659 = vmax.f32 %v1623, 0.0
    %v1660 = vmax.f32 %v1624, 0.0
    %v1661 = vmax.f32 %v1625, 0.0
    %v1662 = vmax.f32 %v1626, 0.0
    %v1663 = vmax.f32 %v1627, 0.0
    %v1664 = vmax.f32 %v1628, 0.0
    %v1665 = vmax.f32 %v1629, 0.0
    %v1666 = vmax.f32 %v1630, 0.0
    %v1667 = vmax.f32 %v1631, 0.0
    %v1668 = vmax.f32 %v1632, 0.0
    %v1669 = vmax.f32 %v1633, 0.0
    %v1670 = vmax.f32 %v1634, 0.0
    %v1671 = vmax.f32 %v1635, 0.0
    %v1672 = vmax.f32 %v1636, 0.0
    %v1673 = vmax.f32 %v1637, 0.0
    %v1674 = vmax.f32 %v1638, 0.0
    %v1675 = vmax.f32 %v1639, 0.0
    %v1676 = vmax.f32 %v1640, 0.0
    %v1677 = vmul.f32 %v1605, %v1605
    %v1678 = vmul.f32 %v1606, %v1606
    %v1679 = vmul.f32 %v1607, %v1607
    %v1680 = vmul.f32 %v1608, %v1608
    %v1681 = vmul.f32 %v1609, %v1609
    %v1682 = vmul.f32 %v1610, %v1610
    %v1683 = vmul.f32 %v1611, %v1611
    %v1684 = vmul.f32 %v1612, %v1612
    %v1685 = vmul.f32 %v1613, %v1613
    %v1686 = vmul.f32 %v1614, %v1614
    %v1687 = vmul.f32 %v1615, %v1615
    %v1688 = vmul.f32 %v1616, %v1616
    %v1689 = vmul.f32 %v1617, %v1617
    %v1690 = vmul.f32 %v1618, %v1618
    %v1691 = vmul.f32 %v1619, %v1619
    %v1692 = vmul.f32 %v1620, %v1620
    %v1693 = vmul.f32 %v1621, %v1621
    %v1694 = vmul.f32 %v1622, %v1622
    %v1695 = vmul.f32 %v1623, %v1623
    %v1696 = vmul.f32 %v1624, %v1624
    %v1697 = vmul.f32 %v1625, %v1625
    %v1698 = vmul.f32 %v1626, %v1626
    %v1699 = vmul.f32 %v1627, %v1627
    %v1700 = vmul.f32 %v1628, %v1628
    %v1701 = vmul.f32 %v1629, %v1629
    %v1702 = vmul.f32 %v1630, %v1630
    %v1703 = vmul.f32 %v1631, %v1631
    %v1704 = vmul.f32 %v1632, %v1632
    %v1705 = vmul.f32 %v1633, %v1633
    %v1706 = vmul.f32 %v1634, %v1634
    %v1707 = vmul.f32 %v1635, %v1635
    %v1708 = vmul.f32 %v1636, %v1636
    %v1709 = vmul.f32 %v1637, %v1637
    %v1710 = vmul.f32 %v1638, %v1638
    %v1711 = vmul.f32 %v1639, %v1639
    %v1712 = vmul.f32 %v1640, %v1640
    %v1713 = vadd.f32 %v1677, %v1678
    %vm1714 = vcmask 269312
    %v1715 = vsel %vm1714, %v1679, 0.0
    %v1716 = vadd.f32 %v1713, %v1715
    %v1717 = vadd.f32 %v1716, %v1680
    %v1718 = vadd.f32 %v1717, %v1681
    %v1719 = vsel %vm1714, %v1682, 0.0
    %v1720 = vadd.f32 %v1718, %v1719
    %v1721 = vadd.f32 %v1720, %v1683
    %v1722 = vadd.f32 %v1721, %v1684
    %v1723 = vsel %vm1714, %v1685, 0.0
    %v1724 = vadd.f32 %v1722, %v1723
    %v1725 = vadd.f32 %v1724, %v1686
    %v1726 = vadd.f32 %v1725, %v1687
    %v1727 = vsel %vm1714, %v1688, 0.0
    %v1728 = vadd.f32 %v1726, %v1727
    %v1729 = vadd.f32 %v1728, %v1689
    %v1730 = vadd.f32 %v1729, %v1690
    %v1731 = vsel %vm1714, %v1691, 0.0
    %v1732 = vadd.f32 %v1730, %v1731
    %v1733 = vadd.f32 %v1732, %v1692
    %v1734 = vadd.f32 %v1733, %v1693
    %v1735 = vsel %vm1714, %v1694, 0.0
    %v1736 = vadd.f32 %v1734, %v1735
    %v1737 = vadd.f32 %v1736, %v1695
    %v1738 = vadd.f32 %v1737, %v1696
    %v1739 = vsel %vm1714, %v1697, 0.0
    %v1740 = vadd.f32 %v1738, %v1739
    %v1741 = vadd.f32 %v1740, %v1698
    %v1742 = vadd.f32 %v1741, %v1699
    %v1743 = vsel %vm1714, %v1700, 0.0
    %v1744 = vadd.f32 %v1742, %v1743
    %v1745 = vadd.f32 %v1744, %v1701
    %v1746 = vadd.f32 %v1745, %v1702
    %v1747 = vsel %vm1714, %v1703, 0.0
    %v1748 = vadd.f32 %v1746, %v1747
    %v1749 = vadd.f32 %v1748, %v1704
    %v1750 = vadd.f32 %v1749, %v1705
    %v1751 = vsel %vm1714, %v1706, 0.0
    %v1752 = vadd.f32 %v1750, %v1751
    %v1753 = vadd.f32 %v1752, %v1707
    %v1754 = vadd.f32 %v1753, %v1708
    %v1755 = vsel %vm1714, %v1709, 0.0
    %v1756 = vadd.f32 %v1754, %v1755
    %v1757 = vadd.f32 %v1756, %v1710
    %v1758 = vadd.f32 %v1757, %v1711
    %v1759 = vsel %vm1714, %v1712, 0.0
    %v1760 = vadd.f32 %v1758, %v1759
    %1761 = vadd.xlane.f32.xlu0 %v1760
    %v1762 = vpop.xlane.xlu0 %1761
    %v1763 = vrot.slane %v1762, 4
    %v1764 = vadd.f32 %v1762, %v1763
    %v1765 = vrot.slane %v1764, 2
    %v1766 = vadd.f32 %v1764, %v1765
    %v1767 = vrot.slane %v1766, 1
    %v1768 = vadd.f32 %v1766, %v1767
    %s1769 = vtos %v1768
    %s1770 = sadd.f32 %s1276, %s1769
    %v1771 = vmul.f32 %v1641, %v1641
    %v1772 = vmul.f32 %v1642, %v1642
    %v1773 = vmul.f32 %v1643, %v1643
    %v1774 = vmul.f32 %v1644, %v1644
    %v1775 = vmul.f32 %v1645, %v1645
    %v1776 = vmul.f32 %v1646, %v1646
    %v1777 = vmul.f32 %v1647, %v1647
    %v1778 = vmul.f32 %v1648, %v1648
    %v1779 = vmul.f32 %v1649, %v1649
    %v1780 = vmul.f32 %v1650, %v1650
    %v1781 = vmul.f32 %v1651, %v1651
    %v1782 = vmul.f32 %v1652, %v1652
    %v1783 = vmul.f32 %v1653, %v1653
    %v1784 = vmul.f32 %v1654, %v1654
    %v1785 = vmul.f32 %v1655, %v1655
    %v1786 = vmul.f32 %v1656, %v1656
    %v1787 = vmul.f32 %v1657, %v1657
    %v1788 = vmul.f32 %v1658, %v1658
    %v1789 = vmul.f32 %v1659, %v1659
    %v1790 = vmul.f32 %v1660, %v1660
    %v1791 = vmul.f32 %v1661, %v1661
    %v1792 = vmul.f32 %v1662, %v1662
    %v1793 = vmul.f32 %v1663, %v1663
    %v1794 = vmul.f32 %v1664, %v1664
    %v1795 = vmul.f32 %v1665, %v1665
    %v1796 = vmul.f32 %v1666, %v1666
    %v1797 = vmul.f32 %v1667, %v1667
    %v1798 = vmul.f32 %v1668, %v1668
    %v1799 = vmul.f32 %v1669, %v1669
    %v1800 = vmul.f32 %v1670, %v1670
    %v1801 = vmul.f32 %v1671, %v1671
    %v1802 = vmul.f32 %v1672, %v1672
    %v1803 = vmul.f32 %v1673, %v1673
    %v1804 = vmul.f32 %v1674, %v1674
    %v1805 = vmul.f32 %v1675, %v1675
    %v1806 = vmul.f32 %v1676, %v1676
    %v1807 = vadd.f32 %v1771, %v1772
    %v1808 = vsel %vm1714, %v1773, 0.0
    %v1809 = vadd.f32 %v1807, %v1808
    %v1810 = vadd.f32 %v1809, %v1774
    %v1811 = vadd.f32 %v1810, %v1775
    %v1812 = vsel %vm1714, %v1776, 0.0
    %v1813 = vadd.f32 %v1811, %v1812
    %v1814 = vadd.f32 %v1813, %v1777
    %v1815 = vadd.f32 %v1814, %v1778
    %v1816 = vsel %vm1714, %v1779, 0.0
    %v1817 = vadd.f32 %v1815, %v1816
    %v1818 = vadd.f32 %v1817, %v1780
    %v1819 = vadd.f32 %v1818, %v1781
    %v1820 = vsel %vm1714, %v1782, 0.0
    %v1821 = vadd.f32 %v1819, %v1820
    %v1822 = vadd.f32 %v1821, %v1783
    %v1823 = vadd.f32 %v1822, %v1784
    %v1824 = vsel %vm1714, %v1785, 0.0
    %v1825 = vadd.f32 %v1823, %v1824
    %v1826 = vadd.f32 %v1825, %v1786
    %v1827 = vadd.f32 %v1826, %v1787
    %v1828 = vsel %vm1714, %v1788, 0.0
    %v1829 = vadd.f32 %v1827, %v1828
    %v1830 = vadd.f32 %v1829, %v1789
    %v1831 = vadd.f32 %v1830, %v1790
    %v1832 = vsel %vm1714, %v1791, 0.0
    %v1833 = vadd.f32 %v1831, %v1832
    %v1834 = vadd.f32 %v1833, %v1792
    %v1835 = vadd.f32 %v1834, %v1793
    %v1836 = vsel %vm1714, %v1794, 0.0
    %v1837 = vadd.f32 %v1835, %v1836
    %v1838 = vadd.f32 %v1837, %v1795
    %v1839 = vadd.f32 %v1838, %v1796
    %v1840 = vsel %vm1714, %v1797, 0.0
    %v1841 = vadd.f32 %v1839, %v1840
    %v1842 = vadd.f32 %v1841, %v1798
    %v1843 = vadd.f32 %v1842, %v1799
    %v1844 = vsel %vm1714, %v1800, 0.0
    %v1845 = vadd.f32 %v1843, %v1844
    %v1846 = vadd.f32 %v1845, %v1801
    %v1847 = vadd.f32 %v1846, %v1802
    %v1848 = vsel %vm1714, %v1803, 0.0
    %v1849 = vadd.f32 %v1847, %v1848
    %v1850 = vadd.f32 %v1849, %v1804
    %v1851 = vadd.f32 %v1850, %v1805
    %v1852 = vsel %vm1714, %v1806, 0.0
    %v1853 = vadd.f32 %v1851, %v1852
    %1854 = vadd.xlane.f32.xlu0 %v1853
    %v1855 = vpop.xlane.xlu0 %1854
    %v1856 = vrot.slane %v1855, 4
    %v1857 = vadd.f32 %v1855, %v1856
    %v1858 = vrot.slane %v1857, 2
    %v1859 = vadd.f32 %v1857, %v1858
    %v1860 = vrot.slane %v1859, 1
    %v1861 = vadd.f32 %v1859, %v1860
    %s1862 = vtos %v1861
    %s1863 = sadd.f32 %s1477, %s1862
    %v1864 = vsel %vm517, %v1677, 0.0
    %v1865 = vsel %vm517, %v1678, 0.0
    %v1866 = vadd.f32 %v1864, %v1865
    %vm1867 = vcmask 262144
    %v1868 = vsel %vm1867, %v1679, 0.0
    %v1869 = vadd.f32 %v1866, %v1868
    %v1870 = vsel %vm517, %v1683, 0.0
    %v1871 = vadd.f32 %v1869, %v1870
    %v1872 = vsel %vm517, %v1684, 0.0
    %v1873 = vadd.f32 %v1871, %v1872
    %v1874 = vsel %vm1867, %v1685, 0.0
    %v1875 = vadd.f32 %v1873, %v1874
    %v1876 = vsel %vm517, %v1689, 0.0
    %v1877 = vadd.f32 %v1875, %v1876
    %v1878 = vsel %vm517, %v1690, 0.0
    %v1879 = vadd.f32 %v1877, %v1878
    %v1880 = vsel %vm1867, %v1691, 0.0
    %v1881 = vadd.f32 %v1879, %v1880
    %v1882 = vsel %vm517, %v1695, 0.0
    %v1883 = vadd.f32 %v1881, %v1882
    %v1884 = vsel %vm517, %v1696, 0.0
    %v1885 = vadd.f32 %v1883, %v1884
    %v1886 = vsel %vm1867, %v1697, 0.0
    %v1887 = vadd.f32 %v1885, %v1886
    %v1888 = vsel %vm517, %v1701, 0.0
    %v1889 = vadd.f32 %v1887, %v1888
    %v1890 = vsel %vm517, %v1702, 0.0
    %v1891 = vadd.f32 %v1889, %v1890
    %v1892 = vsel %vm1867, %v1703, 0.0
    %v1893 = vadd.f32 %v1891, %v1892
    %v1894 = vsel %vm517, %v1707, 0.0
    %v1895 = vadd.f32 %v1893, %v1894
    %v1896 = vsel %vm517, %v1708, 0.0
    %v1897 = vadd.f32 %v1895, %v1896
    %v1898 = vsel %vm1867, %v1709, 0.0
    %v1899 = vadd.f32 %v1897, %v1898
    %1900 = vadd.xlane.f32.xlu0 %v1899
    %v1901 = vpop.xlane.xlu0 %1900
    %v1902 = vrot.slane %v1901, 4
    %v1903 = vadd.f32 %v1901, %v1902
    %v1904 = vrot.slane %v1903, 2
    %v1905 = vadd.f32 %v1903, %v1904
    %v1906 = vrot.slane %v1905, 1
    %v1907 = vadd.f32 %v1905, %v1906
    %s1908 = vtos %v1907
    %s1909 = sadd.f32 %s1770, %s1908
    %v1928 = vrot.slane %v1680, 7
    %v1929 = vrot.slane %v1681, 7
    %v1930 = vrot.slane %v1682, 7
    %v1931 = vrot.slane %v1686, 7
    %v1932 = vrot.slane %v1687, 7
    %v1933 = vrot.slane %v1688, 7
    %v1934 = vrot.slane %v1692, 7
    %v1935 = vrot.slane %v1693, 7
    %v1936 = vrot.slane %v1694, 7
    %v1937 = vrot.slane %v1698, 7
    %v1938 = vrot.slane %v1699, 7
    %v1939 = vrot.slane %v1700, 7
    %v1940 = vrot.slane %v1704, 7
    %v1941 = vrot.slane %v1705, 7
    %v1942 = vrot.slane %v1706, 7
    %v1943 = vrot.slane %v1710, 7
    %v1944 = vrot.slane %v1711, 7
    %v1945 = vrot.slane %v1712, 7
    %v1964 = vsel %vm517, %v1928, 0.0
    %v1965 = vsel %vm517, %v1929, 0.0
    %v1966 = vadd.f32 %v1964, %v1965
    %v1967 = vsel %vm1867, %v1930, 0.0
    %v1968 = vadd.f32 %v1966, %v1967
    %v1969 = vsel %vm517, %v1931, 0.0
    %v1970 = vadd.f32 %v1968, %v1969
    %v1971 = vsel %vm517, %v1932, 0.0
    %v1972 = vadd.f32 %v1970, %v1971
    %v1973 = vsel %vm1867, %v1933, 0.0
    %v1974 = vadd.f32 %v1972, %v1973
    %v1975 = vsel %vm517, %v1934, 0.0
    %v1976 = vadd.f32 %v1974, %v1975
    %v1977 = vsel %vm517, %v1935, 0.0
    %v1978 = vadd.f32 %v1976, %v1977
    %v1979 = vsel %vm1867, %v1936, 0.0
    %v1980 = vadd.f32 %v1978, %v1979
    %v1981 = vsel %vm517, %v1937, 0.0
    %v1982 = vadd.f32 %v1980, %v1981
    %v1983 = vsel %vm517, %v1938, 0.0
    %v1984 = vadd.f32 %v1982, %v1983
    %v1985 = vsel %vm1867, %v1939, 0.0
    %v1986 = vadd.f32 %v1984, %v1985
    %v1987 = vsel %vm517, %v1940, 0.0
    %v1988 = vadd.f32 %v1986, %v1987
    %v1989 = vsel %vm517, %v1941, 0.0
    %v1990 = vadd.f32 %v1988, %v1989
    %v1991 = vsel %vm1867, %v1942, 0.0
    %v1992 = vadd.f32 %v1990, %v1991
    %v1993 = vsel %vm517, %v1943, 0.0
    %v1994 = vadd.f32 %v1992, %v1993
    %v1995 = vsel %vm517, %v1944, 0.0
    %v1996 = vadd.f32 %v1994, %v1995
    %v1997 = vsel %vm1867, %v1945, 0.0
    %v1998 = vadd.f32 %v1996, %v1997
    %1999 = vadd.xlane.f32.xlu0 %v1998
    %v2000 = vpop.xlane.xlu0 %1999
    %v2001 = vrot.slane %v2000, 4
    %v2002 = vadd.f32 %v2000, %v2001
    %v2003 = vrot.slane %v2002, 2
    %v2004 = vadd.f32 %v2002, %v2003
    %v2005 = vrot.slane %v2004, 1
    %v2006 = vadd.f32 %v2004, %v2005
    %s2007 = vtos %v2006
    %s2008 = sadd.f32 %s1909, %s2007
    %v2009 = vsel %vm517, %v1771, 0.0
    %v2010 = vsel %vm517, %v1772, 0.0
    %v2011 = vadd.f32 %v2009, %v2010
    %v2012 = vsel %vm1867, %v1773, 0.0
    %v2013 = vadd.f32 %v2011, %v2012
    %v2014 = vsel %vm517, %v1777, 0.0
    %v2015 = vadd.f32 %v2013, %v2014
    %v2016 = vsel %vm517, %v1778, 0.0
    %v2017 = vadd.f32 %v2015, %v2016
    %v2018 = vsel %vm1867, %v1779, 0.0
    %v2019 = vadd.f32 %v2017, %v2018
    %v2020 = vsel %vm517, %v1783, 0.0
    %v2021 = vadd.f32 %v2019, %v2020
    %v2022 = vsel %vm517, %v1784, 0.0
    %v2023 = vadd.f32 %v2021, %v2022
    %v2024 = vsel %vm1867, %v1785, 0.0
    %v2025 = vadd.f32 %v2023, %v2024
    %v2026 = vsel %vm517, %v1789, 0.0
    %v2027 = vadd.f32 %v2025, %v2026
    %v2028 = vsel %vm517, %v1790, 0.0
    %v2029 = vadd.f32 %v2027, %v2028
    %v2030 = vsel %vm1867, %v1791, 0.0
    %v2031 = vadd.f32 %v2029, %v2030
    %v2032 = vsel %vm517, %v1795, 0.0
    %v2033 = vadd.f32 %v2031, %v2032
    %v2034 = vsel %vm517, %v1796, 0.0
    %v2035 = vadd.f32 %v2033, %v2034
    %v2036 = vsel %vm1867, %v1797, 0.0
    %v2037 = vadd.f32 %v2035, %v2036
    %v2038 = vsel %vm517, %v1801, 0.0
    %v2039 = vadd.f32 %v2037, %v2038
    %v2040 = vsel %vm517, %v1802, 0.0
    %v2041 = vadd.f32 %v2039, %v2040
    %v2042 = vsel %vm1867, %v1803, 0.0
    %v2043 = vadd.f32 %v2041, %v2042
    %2044 = vadd.xlane.f32.xlu0 %v2043
    %v2045 = vpop.xlane.xlu0 %2044
    %v2046 = vrot.slane %v2045, 4
    %v2047 = vadd.f32 %v2045, %v2046
    %v2048 = vrot.slane %v2047, 2
    %v2049 = vadd.f32 %v2047, %v2048
    %v2050 = vrot.slane %v2049, 1
    %v2051 = vadd.f32 %v2049, %v2050
    %s2052 = vtos %v2051
    %v2071 = vrot.slane %v1774, 7
    %v2072 = vrot.slane %v1775, 7
    %v2073 = vrot.slane %v1776, 7
    %v2074 = vrot.slane %v1780, 7
    %v2075 = vrot.slane %v1781, 7
    %v2076 = vrot.slane %v1782, 7
    %v2077 = vrot.slane %v1786, 7
    %v2078 = vrot.slane %v1787, 7
    %v2079 = vrot.slane %v1788, 7
    %v2080 = vrot.slane %v1792, 7
    %v2081 = vrot.slane %v1793, 7
    %v2082 = vrot.slane %v1794, 7
    %v2083 = vrot.slane %v1798, 7
    %v2084 = vrot.slane %v1799, 7
    %v2085 = vrot.slane %v1800, 7
    %v2086 = vrot.slane %v1804, 7
    %v2087 = vrot.slane %v1805, 7
    %v2088 = vrot.slane %v1806, 7
    %v2107 = vsel %vm517, %v2071, 0.0
    %v2108 = vsel %vm517, %v2072, 0.0
    %v2109 = vadd.f32 %v2107, %v2108
    %v2110 = vsel %vm1867, %v2073, 0.0
    %v2111 = vadd.f32 %v2109, %v2110
    %v2112 = vsel %vm517, %v2074, 0.0
    %v2113 = vadd.f32 %v2111, %v2112
    %v2114 = vsel %vm517, %v2075, 0.0
    %v2115 = vadd.f32 %v2113, %v2114
    %v2116 = vsel %vm1867, %v2076, 0.0
    %v2117 = vadd.f32 %v2115, %v2116
    %v2118 = vsel %vm517, %v2077, 0.0
    %v2119 = vadd.f32 %v2117, %v2118
    %v2120 = vsel %vm517, %v2078, 0.0
    %v2121 = vadd.f32 %v2119, %v2120
    %v2122 = vsel %vm1867, %v2079, 0.0
    %v2123 = vadd.f32 %v2121, %v2122
    %v2124 = vsel %vm517, %v2080, 0.0
    %v2125 = vadd.f32 %v2123, %v2124
    %v2126 = vsel %vm517, %v2081, 0.0
    %v2127 = vadd.f32 %v2125, %v2126
    %v2128 = vsel %vm1867, %v2082, 0.0
    %v2129 = vadd.f32 %v2127, %v2128
    %v2130 = vsel %vm517, %v2083, 0.0
    %v2131 = vadd.f32 %v2129, %v2130
    %v2132 = vsel %vm517, %v2084, 0.0
    %v2133 = vadd.f32 %v2131, %v2132
    %v2134 = vsel %vm1867, %v2085, 0.0
    %v2135 = vadd.f32 %v2133, %v2134
    %v2136 = vsel %vm517, %v2086, 0.0
    %v2137 = vadd.f32 %v2135, %v2136
    %v2138 = vsel %vm517, %v2087, 0.0
    %v2139 = vadd.f32 %v2137, %v2138
    %v2140 = vsel %vm1867, %v2088, 0.0
    %v2141 = vadd.f32 %v2139, %v2140
    %2142 = vadd.xlane.f32.xlu0 %v2141
    %v2143 = vpop.xlane.xlu0 %2142
    %v2144 = vrot.slane %v2143, 4
    %v2145 = vadd.f32 %v2143, %v2144
    %v2146 = vrot.slane %v2145, 2
    %v2147 = vadd.f32 %v2145, %v2146
    %v2148 = vrot.slane %v2147, 1
    %v2149 = vadd.f32 %v2147, %v2148
    %s2150 = vtos %v2149
    %s2151 = sadd.f32 %s2052, %s2150
    %s2152 = smul.f32 %s2151, 3.0
    %s2153 = sadd.f32 %s1863, %s2152
    %s2154 = sld [smem:[#allocation2]]
    %s2155 = sadd.f32 %s2154, %s2008
    %s2156 = scalar_lea.smem [#allocation2], 0
    %2157 = sst [smem:[%s2156]] %s2155
    %s2158 = sld [smem:[#allocation2 + $0x1]]
    %s2159 = sadd.f32 %s2158, %s2153
    %s2160 = scalar_lea.smem [#allocation2], 1
    %2161 = sst [smem:[%s2160]] %s2159
    // Predicated region
    $region18: #{tpu_custom_call.1} parent=1 // pred_check
      %p2162 = pneg %p15
    $region19: #{tpu_custom_call.1} parent=1 // pred_check_branch
      %2164 = sbr.rel (%p2162) target = $region21
    $region20: #{tpu_custom_call.1} parent=1 // pred_region
      %s2165 = sld [smem:[#allocation2]]
      %s2166 = smul.f32 %s2165, 3.6043828e-05
      %s2167 = scalar_lea.smem [#allocation3], 0
      %2168 = sst [smem:[%s2167]] %s2166
      %s2169 = sld [smem:[#allocation2 + $0x1]]
      %s2170 = smul.f32 %s2169, 3.6043828e-05
      %s2171 = scalar_lea.smem [#allocation3], 1
      %2172 = sst [smem:[%s2171]] %s2170
      %s2173 = scalar_lea.smem [#allocation3], 2
      %2174 = sst [smem:[%s2173]] 0.0
    $region21: #{tpu_custom_call.1} parent=1 // pred_fallthru
      _
    // Predicated region
    $region22: #{tpu_custom_call.1} parent=1 // pred_check
      _
    $region23: #{tpu_custom_call.1} parent=1 // pred_check_branch
      %2176 = sbr.rel (0) target = $region25
    $region24: #{tpu_custom_call.1} parent=1 // pred_region
      %s2178 = ssub.s32 16, 16
      %2179 = vsyncadd [#allocation4], %s2178
      %2182 = dma.smem_to_hbm [#allocation3], 16, %s3, [#allocation4]
    $region25: #{tpu_custom_call.1} parent=1 // pred_fallthru
      _
    // Predicated region
    $region26: #{tpu_custom_call.1} parent=1 // pred_check
      _
    $region27: #{tpu_custom_call.1} parent=1 // pred_check_branch
      %2184 = sbr.rel (0) target = $region29
    $region28: #{tpu_custom_call.1} parent=1 // pred_region
      %2185 = dma.done [#allocation4], 16
    $region29: #{tpu_custom_call.1} parent=1 // pred_fallthru
      _
    %2186 = sfence
    %2187 = vsyncpa [#allocation4], 1

</llo_original>
